<compile_context>
chip_gen: v7x
topology: tpu7x:2x2x1
jax: 0.10.0
libtpu: 0.0.40
codegen_flags: <defaults>
</compile_context>

<pallas_src>
import functools

import jax
import jax.numpy as jnp
from jax.experimental import pallas as pl
from jax.experimental.pallas import tpu as pltpu

H_DIM = 64      # h_dim
EMB_DIM = 64    # spatial embedding dim
CONT_DIM = 256  # cont_dim
V_DIM = 2       # v_dim


def disc_kernel(pred_ref, cond_ref, wx_ref, bx_ref, whh_ref,
                vlat_ref, vcond_ref, bout_ref, out_ref, *, seq_len):
    batch = cond_ref.shape[0]
    h_dim = whh_ref.shape[0]

    # Condition branch of the (pre-fused) classifier: independent of the LSTM,
    # issue it first so its MXU latency hides under the serial recurrence.
    cond_score = (jnp.dot(cond_ref[...], vcond_ref[...],
                          preferred_element_type=jnp.float32)
                  + bout_ref[...])

    # Hoist the fused input-projection bias broadcast out of the loop.
    bx = jnp.broadcast_to(bx_ref[...], (batch, 4 * h_dim))

    h = jnp.zeros((batch, h_dim), jnp.float32)
    c = jnp.zeros((batch, h_dim), jnp.float32)

    # seq_len is tiny and static -> fully unroll the serial recurrence so
    # consecutive steps' MXU / EUP work can interleave.
    # Fused gate lane order: i | f | g | o  (each h_dim=64 lanes wide).
    for t in range(seq_len):
        # x-dependent gate part: independent of h, overlaps with the chain.
        g_x = jnp.dot(pred_ref[t], wx_ref[...],
                      preferred_element_type=jnp.float32) + bx
        g_all = g_x + jnp.dot(h, whh_ref[...],
                              preferred_element_type=jnp.float32)
        # i and f are lane-adjacent -> one full-vreg (128-lane) sigmoid push.
        sig_if = jax.nn.sigmoid(g_all[:, 0:2 * h_dim])
        i_g = sig_if[:, 0:h_dim]
        f_g = sig_if[:, h_dim:2 * h_dim]
        g_g = jnp.tanh(g_all[:, 2 * h_dim:3 * h_dim])
        o_g = jax.nn.sigmoid(g_all[:, 3 * h_dim:4 * h_dim])
        c = f_g * c + i_g * g_g
        h = o_g * jnp.tanh(c)

    # Latent branch of the classifier + LeakyReLU tail.
    score = (jnp.dot(h, vlat_ref[...], preferred_element_type=jnp.float32)
             + cond_score)
    out_ref[...] = jax.nn.leaky_relu(score, negative_slope=0.01)


def init_params(key):
    ks = jax.random.split(key, 12)
    s = 0.1
    p = {
        # spatial embedding Linear(v_dim=2 -> emb_dim)
        "w_emb": jax.random.normal(ks[0], (V_DIM, EMB_DIM), jnp.float32) * s,
        "b_emb": jax.random.normal(ks[1], (1, EMB_DIM), jnp.float32) * s,
        # LSTM weights, per gate (i, f, g, o): stacked along leading axis
        "wih": jax.random.normal(ks[2], (4, EMB_DIM, H_DIM), jnp.float32) * s,
        "whh": jax.random.normal(ks[3], (4, H_DIM, H_DIM), jnp.float32) * s,
        # combined bias per gate (b_ih + b_hh)
        "blstm": jax.random.normal(ks[4], (4, 1, H_DIM), jnp.float32) * s,
        # classifier Linear(h_dim + cont_dim -> 256), split into two blocks
        "w1_lat": jax.random.normal(ks[5], (H_DIM, 256), jnp.float32) * s,
        "w1_cond": jax.random.normal(ks[6], (CONT_DIM, 256), jnp.float32) * s,
        "b1": jax.random.normal(ks[7], (1, 256), jnp.float32) * s,
        # classifier Linear(256 -> 1)
        "w2": jax.random.normal(ks[8], (256, 1), jnp.float32) * s,
        "b2": jax.random.normal(ks[9], (1, 1), jnp.float32) * s,
    }
    return p


def fuse_params(params):
    """One-time (init-time) weight fusion -- NOT in the per-call hot path."""
    # Lane-fuse per-gate LSTM weights: (EMB,4H), (H,4H), (1,4H); order i|f|g|o.
    wih_f = jnp.concatenate([params["wih"][k] for k in range(4)], axis=1)
    whh_f = jnp.concatenate([params["whh"][k] for k in range(4)], axis=1)
    blstm_f = jnp.concatenate([params["blstm"][k] for k in range(4)], axis=1)
    # Fold the spatial-embedding Linear into the input projection.
    wx = params["w_emb"] @ wih_f                        # (V_DIM, 4H)
    bx = params["b_emb"] @ wih_f + blstm_f              # (1, 4H)
    # Fuse the two activation-free classifier Linears.
    v_lat = params["w1_lat"] @ params["w2"]             # (H, 1)
    v_cond = params["w1_cond"] @ params["w2"]           # (CONT_DIM, 1)
    b_out = params["b1"] @ params["w2"] + params["b2"]  # (1, 1)
    return {"wx": wx, "bx": bx, "whh": whh_f,
            "v_lat": v_lat, "v_cond": v_cond, "b_out": b_out}


def discriminator_forward(pred, condition, fused):
    """Per-call path: a single gridless pallas_call, no wrapper HLO ops."""
    seq_len, batch, _ = pred.shape
    vmem = pl.BlockSpec(memory_space=pltpu.MemorySpace.VMEM)
    args = (pred, condition, fused["wx"], fused["bx"], fused["whh"],
            fused["v_lat"], fused["v_cond"], fused["b_out"])
    return pl.pallas_call(
        functools.partial(disc_kernel, seq_len=seq_len),
        out_shape=jax.ShapeDtypeStruct((batch, 1), jnp.float32),
        in_specs=[vmem] * len(args),
        out_specs=vmem,
    )(*args)


def discriminator_ref(pred, condition, params):
    """Pure-JAX reference (mirrors the PyTorch forward, un-fused weights)."""
    seq_len, batch, _ = pred.shape
    h = jnp.zeros((batch, H_DIM), jnp.float32)
    c = jnp.zeros((batch, H_DIM), jnp.float32)
    for t in range(seq_len):
        x_emb = pred[t] @ params["w_emb"] + params["b_emb"]
        gates = [x_emb @ params["wih"][k] + h @ params["whh"][k] + params["blstm"][k]
                 for k in range(4)]
        i_g = jax.nn.sigmoid(gates[0])
        f_g = jax.nn.sigmoid(gates[1])
        g_g = jnp.tanh(gates[2])
        o_g = jax.nn.sigmoid(gates[3])
        c = f_g * c + i_g * g_g
        h = o_g * jnp.tanh(c)
    hid = h @ params["w1_lat"] + condition @ params["w1_cond"] + params["b1"]
    score = hid @ params["w2"] + params["b2"]
    return jax.nn.leaky_relu(score, negative_slope=0.01)


if __name__ == "__main__":
    key = jax.random.PRNGKey(0)
    k_pred, k_cond, k_param = jax.random.split(key, 3)

    seq_len, batch = 8, 4
    pred = jax.random.normal(k_pred, (seq_len, batch, V_DIM), jnp.float32)
    condition = jax.random.normal(k_cond, (batch, CONT_DIM), jnp.float32)
    params = init_params(k_param)

    # One-time weight fusion (out of the per-call hot path).
    fused = jax.tree_util.tree_map(jax.block_until_ready, fuse_params(params))

    out = discriminator_forward(pred, condition, fused)
    out = jax.block_until_ready(out)

    ref = jax.block_until_ready(discriminator_ref(pred, condition, params))
    assert out.shape == (batch, 1), out.shape
    assert jnp.allclose(out, ref, atol=1e-3, rtol=1e-3), (out, ref)

    print("KERNEL_OK")
</pallas_src>

<mosaic_0001>
module attributes {stable_mosaic.version = 11 : i64} {
  func.func @disc_kernel(%arg0: memref<8x4x2xf32, #tpu.memory_space<vmem>>, %arg1: memref<4x256xf32, #tpu.memory_space<vmem>>, %arg2: memref<2x256xf32, #tpu.memory_space<vmem>>, %arg3: memref<1x256xf32, #tpu.memory_space<vmem>>, %arg4: memref<64x256xf32, #tpu.memory_space<vmem>>, %arg5: memref<64x1xf32, #tpu.memory_space<vmem>>, %arg6: memref<256x1xf32, #tpu.memory_space<vmem>>, %arg7: memref<1x1xf32, #tpu.memory_space<vmem>>, %arg8: memref<4x1xf32, #tpu.memory_space<vmem>>) attributes {dimension_semantics = [], scalar_prefetch = 0 : i64, scratch_operands = 0 : i64, tpu.core_type = #tpu.core_type<tc>} {
    %c0 = arith.constant 0 : index
    %c0_0 = arith.constant 0 : index
    %0 = vector.load %arg1[%c0, %c0_0] : memref<4x256xf32, #tpu.memory_space<vmem>>, vector<4x256xf32>
    %c0_1 = arith.constant 0 : index
    %c0_2 = arith.constant 0 : index
    %1 = vector.load %arg6[%c0_1, %c0_2] : memref<256x1xf32, #tpu.memory_space<vmem>>, vector<256x1xf32>
    %cst = arith.constant dense<0.000000e+00> : vector<4x1xf32>
    %2 = tpu.matmul %0, %1, %cst {dimension_numbers = #tpu.dot_dimension_numbers<[1], [0], [0], [1], [0, 0, 1, 1], [], []>} : vector<4x256xf32>, vector<256x1xf32>, vector<4x1xf32> -> vector<4x1xf32>
    %c0_3 = arith.constant 0 : index
    %c0_4 = arith.constant 0 : index
    %3 = vector.load %arg7[%c0_3, %c0_4] : memref<1x1xf32, #tpu.memory_space<vmem>>, vector<1x1xf32>
    %4 = vector.broadcast %3 : vector<1x1xf32> to vector<4x1xf32>
    %5 = arith.addf %2, %4 : vector<4x1xf32>
    %c0_5 = arith.constant 0 : index
    %c0_6 = arith.constant 0 : index
    %6 = vector.load %arg3[%c0_5, %c0_6] : memref<1x256xf32, #tpu.memory_space<vmem>>, vector<1x256xf32>
    %7 = vector.shape_cast %6 : vector<1x256xf32> to vector<1x256xf32>
    %8 = vector.broadcast %7 : vector<1x256xf32> to vector<4x256xf32>
    %cst_7 = arith.constant 0.000000e+00 : f32
    %9 = vector.broadcast %cst_7 : f32 to vector<4x64xf32>
    %cst_8 = arith.constant 0.000000e+00 : f32
    %10 = vector.broadcast %cst_8 : f32 to vector<4x64xf32>
    %c0_9 = arith.constant 0 : index
    %c0_10 = arith.constant 0 : index
    %c0_11 = arith.constant 0 : index
    %11 = vector.load %arg0[%c0_9, %c0_10, %c0_11] : memref<8x4x2xf32, #tpu.memory_space<vmem>>, vector<1x4x2xf32>
    %12 = vector.shape_cast %11 : vector<1x4x2xf32> to vector<4x2xf32>
    %c0_12 = arith.constant 0 : index
    %c0_13 = arith.constant 0 : index
    %13 = vector.load %arg2[%c0_12, %c0_13] : memref<2x256xf32, #tpu.memory_space<vmem>>, vector<2x256xf32>
    %cst_14 = arith.constant dense<0.000000e+00> : vector<4x256xf32>
    %14 = tpu.matmul %12, %13, %cst_14 {dimension_numbers = #tpu.dot_dimension_numbers<[1], [0], [0], [1], [0, 0, 1, 1], [], []>} : vector<4x2xf32>, vector<2x256xf32>, vector<4x256xf32> -> vector<4x256xf32>
    %15 = arith.addf %14, %8 : vector<4x256xf32>
    %c0_15 = arith.constant 0 : index
    %c0_16 = arith.constant 0 : index
    %16 = vector.load %arg4[%c0_15, %c0_16] : memref<64x256xf32, #tpu.memory_space<vmem>>, vector<64x256xf32>
    %cst_17 = arith.constant dense<0.000000e+00> : vector<4x256xf32>
    %17 = tpu.matmul %9, %16, %cst_17 {dimension_numbers = #tpu.dot_dimension_numbers<[1], [0], [0], [1], [0, 0, 1, 1], [], []>} : vector<4x64xf32>, vector<64x256xf32>, vector<4x256xf32> -> vector<4x256xf32>
    %18 = arith.addf %15, %17 : vector<4x256xf32>
    %19 = vector.extract_strided_slice %18 {offsets = [0, 0], sizes = [4, 128], strides = [1, 1]} : vector<4x256xf32> to vector<4x128xf32>
    %20 = arith.negf %19 : vector<4x128xf32>
    %21 = math.exp %20 : vector<4x128xf32>
    %cst_18 = arith.constant 1.000000e+00 : f32
    %22 = vector.broadcast %cst_18 : f32 to vector<4x128xf32>
    %23 = arith.addf %22, %21 : vector<4x128xf32>
    %24 = arith.divf %22, %23 : vector<4x128xf32>
    %25 = vector.extract_strided_slice %24 {offsets = [0, 0], sizes = [4, 64], strides = [1, 1]} : vector<4x128xf32> to vector<4x64xf32>
    %26 = vector.extract_strided_slice %24 {offsets = [0, 64], sizes = [4, 64], strides = [1, 1]} : vector<4x128xf32> to vector<4x64xf32>
    %27 = vector.extract_strided_slice %18 {offsets = [0, 128], sizes = [4, 64], strides = [1, 1]} : vector<4x256xf32> to vector<4x64xf32>
    %28 = math.tanh %27 : vector<4x64xf32>
    %29 = vector.extract_strided_slice %18 {offsets = [0, 192], sizes = [4, 64], strides = [1, 1]} : vector<4x256xf32> to vector<4x64xf32>
    %30 = arith.negf %29 : vector<4x64xf32>
    %31 = math.exp %30 : vector<4x64xf32>
    %cst_19 = arith.constant 1.000000e+00 : f32
    %32 = vector.broadcast %cst_19 : f32 to vector<4x64xf32>
    %33 = arith.addf %32, %31 : vector<4x64xf32>
    %34 = arith.divf %32, %33 : vector<4x64xf32>
    %35 = arith.mulf %26, %10 : vector<4x64xf32>
    %36 = arith.mulf %25, %28 : vector<4x64xf32>
    %37 = arith.addf %35, %36 : vector<4x64xf32>
    %38 = math.tanh %37 : vector<4x64xf32>
    %39 = arith.mulf %34, %38 : vector<4x64xf32>
    %c1 = arith.constant 1 : index
    %c0_20 = arith.constant 0 : index
    %c0_21 = arith.constant 0 : index
    %40 = vector.load %arg0[%c1, %c0_20, %c0_21] : memref<8x4x2xf32, #tpu.memory_space<vmem>>, vector<1x4x2xf32>
    %41 = vector.shape_cast %40 : vector<1x4x2xf32> to vector<4x2xf32>
    %c0_22 = arith.constant 0 : index
    %c0_23 = arith.constant 0 : index
    %42 = vector.load %arg2[%c0_22, %c0_23] : memref<2x256xf32, #tpu.memory_space<vmem>>, vector<2x256xf32>
    %cst_24 = arith.constant dense<0.000000e+00> : vector<4x256xf32>
    %43 = tpu.matmul %41, %42, %cst_24 {dimension_numbers = #tpu.dot_dimension_numbers<[1], [0], [0], [1], [0, 0, 1, 1], [], []>} : vector<4x2xf32>, vector<2x256xf32>, vector<4x256xf32> -> vector<4x256xf32>
    %44 = arith.addf %43, %8 : vector<4x256xf32>
    %c0_25 = arith.constant 0 : index
    %c0_26 = arith.constant 0 : index
    %45 = vector.load %arg4[%c0_25, %c0_26] : memref<64x256xf32, #tpu.memory_space<vmem>>, vector<64x256xf32>
    %cst_27 = arith.constant dense<0.000000e+00> : vector<4x256xf32>
    %46 = tpu.matmul %39, %45, %cst_27 {dimension_numbers = #tpu.dot_dimension_numbers<[1], [0], [0], [1], [0, 0, 1, 1], [], []>} : vector<4x64xf32>, vector<64x256xf32>, vector<4x256xf32> -> vector<4x256xf32>
    %47 = arith.addf %44, %46 : vector<4x256xf32>
    %48 = vector.extract_strided_slice %47 {offsets = [0, 0], sizes = [4, 128], strides = [1, 1]} : vector<4x256xf32> to vector<4x128xf32>
    %49 = arith.negf %48 : vector<4x128xf32>
    %50 = math.exp %49 : vector<4x128xf32>
    %cst_28 = arith.constant 1.000000e+00 : f32
    %51 = vector.broadcast %cst_28 : f32 to vector<4x128xf32>
    %52 = arith.addf %51, %50 : vector<4x128xf32>
    %53 = arith.divf %51, %52 : vector<4x128xf32>
    %54 = vector.extract_strided_slice %53 {offsets = [0, 0], sizes = [4, 64], strides = [1, 1]} : vector<4x128xf32> to vector<4x64xf32>
    %55 = vector.extract_strided_slice %53 {offsets = [0, 64], sizes = [4, 64], strides = [1, 1]} : vector<4x128xf32> to vector<4x64xf32>
    %56 = vector.extract_strided_slice %47 {offsets = [0, 128], sizes = [4, 64], strides = [1, 1]} : vector<4x256xf32> to vector<4x64xf32>
    %57 = math.tanh %56 : vector<4x64xf32>
    %58 = vector.extract_strided_slice %47 {offsets = [0, 192], sizes = [4, 64], strides = [1, 1]} : vector<4x256xf32> to vector<4x64xf32>
    %59 = arith.negf %58 : vector<4x64xf32>
    %60 = math.exp %59 : vector<4x64xf32>
    %cst_29 = arith.constant 1.000000e+00 : f32
    %61 = vector.broadcast %cst_29 : f32 to vector<4x64xf32>
    %62 = arith.addf %61, %60 : vector<4x64xf32>
    %63 = arith.divf %61, %62 : vector<4x64xf32>
    %64 = arith.mulf %55, %37 : vector<4x64xf32>
    %65 = arith.mulf %54, %57 : vector<4x64xf32>
    %66 = arith.addf %64, %65 : vector<4x64xf32>
    %67 = math.tanh %66 : vector<4x64xf32>
    %68 = arith.mulf %63, %67 : vector<4x64xf32>
    %c2 = arith.constant 2 : index
    %c0_30 = arith.constant 0 : index
    %c0_31 = arith.constant 0 : index
    %69 = vector.load %arg0[%c2, %c0_30, %c0_31] : memref<8x4x2xf32, #tpu.memory_space<vmem>>, vector<1x4x2xf32>
    %70 = vector.shape_cast %69 : vector<1x4x2xf32> to vector<4x2xf32>
    %c0_32 = arith.constant 0 : index
    %c0_33 = arith.constant 0 : index
    %71 = vector.load %arg2[%c0_32, %c0_33] : memref<2x256xf32, #tpu.memory_space<vmem>>, vector<2x256xf32>
    %cst_34 = arith.constant dense<0.000000e+00> : vector<4x256xf32>
    %72 = tpu.matmul %70, %71, %cst_34 {dimension_numbers = #tpu.dot_dimension_numbers<[1], [0], [0], [1], [0, 0, 1, 1], [], []>} : vector<4x2xf32>, vector<2x256xf32>, vector<4x256xf32> -> vector<4x256xf32>
    %73 = arith.addf %72, %8 : vector<4x256xf32>
    %c0_35 = arith.constant 0 : index
    %c0_36 = arith.constant 0 : index
    %74 = vector.load %arg4[%c0_35, %c0_36] : memref<64x256xf32, #tpu.memory_space<vmem>>, vector<64x256xf32>
    %cst_37 = arith.constant dense<0.000000e+00> : vector<4x256xf32>
    %75 = tpu.matmul %68, %74, %cst_37 {dimension_numbers = #tpu.dot_dimension_numbers<[1], [0], [0], [1], [0, 0, 1, 1], [], []>} : vector<4x64xf32>, vector<64x256xf32>, vector<4x256xf32> -> vector<4x256xf32>
    %76 = arith.addf %73, %75 : vector<4x256xf32>
    %77 = vector.extract_strided_slice %76 {offsets = [0, 0], sizes = [4, 128], strides = [1, 1]} : vector<4x256xf32> to vector<4x128xf32>
    %78 = arith.negf %77 : vector<4x128xf32>
    %79 = math.exp %78 : vector<4x128xf32>
    %cst_38 = arith.constant 1.000000e+00 : f32
    %80 = vector.broadcast %cst_38 : f32 to vector<4x128xf32>
    %81 = arith.addf %80, %79 : vector<4x128xf32>
    %82 = arith.divf %80, %81 : vector<4x128xf32>
    %83 = vector.extract_strided_slice %82 {offsets = [0, 0], sizes = [4, 64], strides = [1, 1]} : vector<4x128xf32> to vector<4x64xf32>
    %84 = vector.extract_strided_slice %82 {offsets = [0, 64], sizes = [4, 64], strides = [1, 1]} : vector<4x128xf32> to vector<4x64xf32>
    %85 = vector.extract_strided_slice %76 {offsets = [0, 128], sizes = [4, 64], strides = [1, 1]} : vector<4x256xf32> to vector<4x64xf32>
    %86 = math.tanh %85 : vector<4x64xf32>
    %87 = vector.extract_strided_slice %76 {offsets = [0, 192], sizes = [4, 64], strides = [1, 1]} : vector<4x256xf32> to vector<4x64xf32>
    %88 = arith.negf %87 : vector<4x64xf32>
    %89 = math.exp %88 : vector<4x64xf32>
    %cst_39 = arith.constant 1.000000e+00 : f32
    %90 = vector.broadcast %cst_39 : f32 to vector<4x64xf32>
    %91 = arith.addf %90, %89 : vector<4x64xf32>
    %92 = arith.divf %90, %91 : vector<4x64xf32>
    %93 = arith.mulf %84, %66 : vector<4x64xf32>
    %94 = arith.mulf %83, %86 : vector<4x64xf32>
    %95 = arith.addf %93, %94 : vector<4x64xf32>
    %96 = math.tanh %95 : vector<4x64xf32>
    %97 = arith.mulf %92, %96 : vector<4x64xf32>
    %c3 = arith.constant 3 : index
    %c0_40 = arith.constant 0 : index
    %c0_41 = arith.constant 0 : index
    %98 = vector.load %arg0[%c3, %c0_40, %c0_41] : memref<8x4x2xf32, #tpu.memory_space<vmem>>, vector<1x4x2xf32>
    %99 = vector.shape_cast %98 : vector<1x4x2xf32> to vector<4x2xf32>
    %c0_42 = arith.constant 0 : index
    %c0_43 = arith.constant 0 : index
    %100 = vector.load %arg2[%c0_42, %c0_43] : memref<2x256xf32, #tpu.memory_space<vmem>>, vector<2x256xf32>
    %cst_44 = arith.constant dense<0.000000e+00> : vector<4x256xf32>
    %101 = tpu.matmul %99, %100, %cst_44 {dimension_numbers = #tpu.dot_dimension_numbers<[1], [0], [0], [1], [0, 0, 1, 1], [], []>} : vector<4x2xf32>, vector<2x256xf32>, vector<4x256xf32> -> vector<4x256xf32>
    %102 = arith.addf %101, %8 : vector<4x256xf32>
    %c0_45 = arith.constant 0 : index
    %c0_46 = arith.constant 0 : index
    %103 = vector.load %arg4[%c0_45, %c0_46] : memref<64x256xf32, #tpu.memory_space<vmem>>, vector<64x256xf32>
    %cst_47 = arith.constant dense<0.000000e+00> : vector<4x256xf32>
    %104 = tpu.matmul %97, %103, %cst_47 {dimension_numbers = #tpu.dot_dimension_numbers<[1], [0], [0], [1], [0, 0, 1, 1], [], []>} : vector<4x64xf32>, vector<64x256xf32>, vector<4x256xf32> -> vector<4x256xf32>
    %105 = arith.addf %102, %104 : vector<4x256xf32>
    %106 = vector.extract_strided_slice %105 {offsets = [0, 0], sizes = [4, 128], strides = [1, 1]} : vector<4x256xf32> to vector<4x128xf32>
    %107 = arith.negf %106 : vector<4x128xf32>
    %108 = math.exp %107 : vector<4x128xf32>
    %cst_48 = arith.constant 1.000000e+00 : f32
    %109 = vector.broadcast %cst_48 : f32 to vector<4x128xf32>
    %110 = arith.addf %109, %108 : vector<4x128xf32>
    %111 = arith.divf %109, %110 : vector<4x128xf32>
    %112 = vector.extract_strided_slice %111 {offsets = [0, 0], sizes = [4, 64], strides = [1, 1]} : vector<4x128xf32> to vector<4x64xf32>
    %113 = vector.extract_strided_slice %111 {offsets = [0, 64], sizes = [4, 64], strides = [1, 1]} : vector<4x128xf32> to vector<4x64xf32>
    %114 = vector.extract_strided_slice %105 {offsets = [0, 128], sizes = [4, 64], strides = [1, 1]} : vector<4x256xf32> to vector<4x64xf32>
    %115 = math.tanh %114 : vector<4x64xf32>
    %116 = vector.extract_strided_slice %105 {offsets = [0, 192], sizes = [4, 64], strides = [1, 1]} : vector<4x256xf32> to vector<4x64xf32>
    %117 = arith.negf %116 : vector<4x64xf32>
    %118 = math.exp %117 : vector<4x64xf32>
    %cst_49 = arith.constant 1.000000e+00 : f32
    %119 = vector.broadcast %cst_49 : f32 to vector<4x64xf32>
    %120 = arith.addf %119, %118 : vector<4x64xf32>
    %121 = arith.divf %119, %120 : vector<4x64xf32>
    %122 = arith.mulf %113, %95 : vector<4x64xf32>
    %123 = arith.mulf %112, %115 : vector<4x64xf32>
    %124 = arith.addf %122, %123 : vector<4x64xf32>
    %125 = math.tanh %124 : vector<4x64xf32>
    %126 = arith.mulf %121, %125 : vector<4x64xf32>
    %c4 = arith.constant 4 : index
    %c0_50 = arith.constant 0 : index
    %c0_51 = arith.constant 0 : index
    %127 = vector.load %arg0[%c4, %c0_50, %c0_51] : memref<8x4x2xf32, #tpu.memory_space<vmem>>, vector<1x4x2xf32>
    %128 = vector.shape_cast %127 : vector<1x4x2xf32> to vector<4x2xf32>
    %c0_52 = arith.constant 0 : index
    %c0_53 = arith.constant 0 : index
    %129 = vector.load %arg2[%c0_52, %c0_53] : memref<2x256xf32, #tpu.memory_space<vmem>>, vector<2x256xf32>
    %cst_54 = arith.constant dense<0.000000e+00> : vector<4x256xf32>
    %130 = tpu.matmul %128, %129, %cst_54 {dimension_numbers = #tpu.dot_dimension_numbers<[1], [0], [0], [1], [0, 0, 1, 1], [], []>} : vector<4x2xf32>, vector<2x256xf32>, vector<4x256xf32> -> vector<4x256xf32>
    %131 = arith.addf %130, %8 : vector<4x256xf32>
    %c0_55 = arith.constant 0 : index
    %c0_56 = arith.constant 0 : index
    %132 = vector.load %arg4[%c0_55, %c0_56] : memref<64x256xf32, #tpu.memory_space<vmem>>, vector<64x256xf32>
    %cst_57 = arith.constant dense<0.000000e+00> : vector<4x256xf32>
    %133 = tpu.matmul %126, %132, %cst_57 {dimension_numbers = #tpu.dot_dimension_numbers<[1], [0], [0], [1], [0, 0, 1, 1], [], []>} : vector<4x64xf32>, vector<64x256xf32>, vector<4x256xf32> -> vector<4x256xf32>
    %134 = arith.addf %131, %133 : vector<4x256xf32>
    %135 = vector.extract_strided_slice %134 {offsets = [0, 0], sizes = [4, 128], strides = [1, 1]} : vector<4x256xf32> to vector<4x128xf32>
    %136 = arith.negf %135 : vector<4x128xf32>
    %137 = math.exp %136 : vector<4x128xf32>
    %cst_58 = arith.constant 1.000000e+00 : f32
    %138 = vector.broadcast %cst_58 : f32 to vector<4x128xf32>
    %139 = arith.addf %138, %137 : vector<4x128xf32>
    %140 = arith.divf %138, %139 : vector<4x128xf32>
    %141 = vector.extract_strided_slice %140 {offsets = [0, 0], sizes = [4, 64], strides = [1, 1]} : vector<4x128xf32> to vector<4x64xf32>
    %142 = vector.extract_strided_slice %140 {offsets = [0, 64], sizes = [4, 64], strides = [1, 1]} : vector<4x128xf32> to vector<4x64xf32>
    %143 = vector.extract_strided_slice %134 {offsets = [0, 128], sizes = [4, 64], strides = [1, 1]} : vector<4x256xf32> to vector<4x64xf32>
    %144 = math.tanh %143 : vector<4x64xf32>
    %145 = vector.extract_strided_slice %134 {offsets = [0, 192], sizes = [4, 64], strides = [1, 1]} : vector<4x256xf32> to vector<4x64xf32>
    %146 = arith.negf %145 : vector<4x64xf32>
    %147 = math.exp %146 : vector<4x64xf32>
    %cst_59 = arith.constant 1.000000e+00 : f32
    %148 = vector.broadcast %cst_59 : f32 to vector<4x64xf32>
    %149 = arith.addf %148, %147 : vector<4x64xf32>
    %150 = arith.divf %148, %149 : vector<4x64xf32>
    %151 = arith.mulf %142, %124 : vector<4x64xf32>
    %152 = arith.mulf %141, %144 : vector<4x64xf32>
    %153 = arith.addf %151, %152 : vector<4x64xf32>
    %154 = math.tanh %153 : vector<4x64xf32>
    %155 = arith.mulf %150, %154 : vector<4x64xf32>
    %c5 = arith.constant 5 : index
    %c0_60 = arith.constant 0 : index
    %c0_61 = arith.constant 0 : index
    %156 = vector.load %arg0[%c5, %c0_60, %c0_61] : memref<8x4x2xf32, #tpu.memory_space<vmem>>, vector<1x4x2xf32>
    %157 = vector.shape_cast %156 : vector<1x4x2xf32> to vector<4x2xf32>
    %c0_62 = arith.constant 0 : index
    %c0_63 = arith.constant 0 : index
    %158 = vector.load %arg2[%c0_62, %c0_63] : memref<2x256xf32, #tpu.memory_space<vmem>>, vector<2x256xf32>
    %cst_64 = arith.constant dense<0.000000e+00> : vector<4x256xf32>
    %159 = tpu.matmul %157, %158, %cst_64 {dimension_numbers = #tpu.dot_dimension_numbers<[1], [0], [0], [1], [0, 0, 1, 1], [], []>} : vector<4x2xf32>, vector<2x256xf32>, vector<4x256xf32> -> vector<4x256xf32>
    %160 = arith.addf %159, %8 : vector<4x256xf32>
    %c0_65 = arith.constant 0 : index
    %c0_66 = arith.constant 0 : index
    %161 = vector.load %arg4[%c0_65, %c0_66] : memref<64x256xf32, #tpu.memory_space<vmem>>, vector<64x256xf32>
    %cst_67 = arith.constant dense<0.000000e+00> : vector<4x256xf32>
    %162 = tpu.matmul %155, %161, %cst_67 {dimension_numbers = #tpu.dot_dimension_numbers<[1], [0], [0], [1], [0, 0, 1, 1], [], []>} : vector<4x64xf32>, vector<64x256xf32>, vector<4x256xf32> -> vector<4x256xf32>
    %163 = arith.addf %160, %162 : vector<4x256xf32>
    %164 = vector.extract_strided_slice %163 {offsets = [0, 0], sizes = [4, 128], strides = [1, 1]} : vector<4x256xf32> to vector<4x128xf32>
    %165 = arith.negf %164 : vector<4x128xf32>
    %166 = math.exp %165 : vector<4x128xf32>
    %cst_68 = arith.constant 1.000000e+00 : f32
    %167 = vector.broadcast %cst_68 : f32 to vector<4x128xf32>
    %168 = arith.addf %167, %166 : vector<4x128xf32>
    %169 = arith.divf %167, %168 : vector<4x128xf32>
    %170 = vector.extract_strided_slice %169 {offsets = [0, 0], sizes = [4, 64], strides = [1, 1]} : vector<4x128xf32> to vector<4x64xf32>
    %171 = vector.extract_strided_slice %169 {offsets = [0, 64], sizes = [4, 64], strides = [1, 1]} : vector<4x128xf32> to vector<4x64xf32>
    %172 = vector.extract_strided_slice %163 {offsets = [0, 128], sizes = [4, 64], strides = [1, 1]} : vector<4x256xf32> to vector<4x64xf32>
    %173 = math.tanh %172 : vector<4x64xf32>
    %174 = vector.extract_strided_slice %163 {offsets = [0, 192], sizes = [4, 64], strides = [1, 1]} : vector<4x256xf32> to vector<4x64xf32>
    %175 = arith.negf %174 : vector<4x64xf32>
    %176 = math.exp %175 : vector<4x64xf32>
    %cst_69 = arith.constant 1.000000e+00 : f32
    %177 = vector.broadcast %cst_69 : f32 to vector<4x64xf32>
    %178 = arith.addf %177, %176 : vector<4x64xf32>
    %179 = arith.divf %177, %178 : vector<4x64xf32>
    %180 = arith.mulf %171, %153 : vector<4x64xf32>
    %181 = arith.mulf %170, %173 : vector<4x64xf32>
    %182 = arith.addf %180, %181 : vector<4x64xf32>
    %183 = math.tanh %182 : vector<4x64xf32>
    %184 = arith.mulf %179, %183 : vector<4x64xf32>
    %c6 = arith.constant 6 : index
    %c0_70 = arith.constant 0 : index
    %c0_71 = arith.constant 0 : index
    %185 = vector.load %arg0[%c6, %c0_70, %c0_71] : memref<8x4x2xf32, #tpu.memory_space<vmem>>, vector<1x4x2xf32>
    %186 = vector.shape_cast %185 : vector<1x4x2xf32> to vector<4x2xf32>
    %c0_72 = arith.constant 0 : index
    %c0_73 = arith.constant 0 : index
    %187 = vector.load %arg2[%c0_72, %c0_73] : memref<2x256xf32, #tpu.memory_space<vmem>>, vector<2x256xf32>
    %cst_74 = arith.constant dense<0.000000e+00> : vector<4x256xf32>
    %188 = tpu.matmul %186, %187, %cst_74 {dimension_numbers = #tpu.dot_dimension_numbers<[1], [0], [0], [1], [0, 0, 1, 1], [], []>} : vector<4x2xf32>, vector<2x256xf32>, vector<4x256xf32> -> vector<4x256xf32>
    %189 = arith.addf %188, %8 : vector<4x256xf32>
    %c0_75 = arith.constant 0 : index
    %c0_76 = arith.constant 0 : index
    %190 = vector.load %arg4[%c0_75, %c0_76] : memref<64x256xf32, #tpu.memory_space<vmem>>, vector<64x256xf32>
    %cst_77 = arith.constant dense<0.000000e+00> : vector<4x256xf32>
    %191 = tpu.matmul %184, %190, %cst_77 {dimension_numbers = #tpu.dot_dimension_numbers<[1], [0], [0], [1], [0, 0, 1, 1], [], []>} : vector<4x64xf32>, vector<64x256xf32>, vector<4x256xf32> -> vector<4x256xf32>
    %192 = arith.addf %189, %191 : vector<4x256xf32>
    %193 = vector.extract_strided_slice %192 {offsets = [0, 0], sizes = [4, 128], strides = [1, 1]} : vector<4x256xf32> to vector<4x128xf32>
    %194 = arith.negf %193 : vector<4x128xf32>
    %195 = math.exp %194 : vector<4x128xf32>
    %cst_78 = arith.constant 1.000000e+00 : f32
    %196 = vector.broadcast %cst_78 : f32 to vector<4x128xf32>
    %197 = arith.addf %196, %195 : vector<4x128xf32>
    %198 = arith.divf %196, %197 : vector<4x128xf32>
    %199 = vector.extract_strided_slice %198 {offsets = [0, 0], sizes = [4, 64], strides = [1, 1]} : vector<4x128xf32> to vector<4x64xf32>
    %200 = vector.extract_strided_slice %198 {offsets = [0, 64], sizes = [4, 64], strides = [1, 1]} : vector<4x128xf32> to vector<4x64xf32>
    %201 = vector.extract_strided_slice %192 {offsets = [0, 128], sizes = [4, 64], strides = [1, 1]} : vector<4x256xf32> to vector<4x64xf32>
    %202 = math.tanh %201 : vector<4x64xf32>
    %203 = vector.extract_strided_slice %192 {offsets = [0, 192], sizes = [4, 64], strides = [1, 1]} : vector<4x256xf32> to vector<4x64xf32>
    %204 = arith.negf %203 : vector<4x64xf32>
    %205 = math.exp %204 : vector<4x64xf32>
    %cst_79 = arith.constant 1.000000e+00 : f32
    %206 = vector.broadcast %cst_79 : f32 to vector<4x64xf32>
    %207 = arith.addf %206, %205 : vector<4x64xf32>
    %208 = arith.divf %206, %207 : vector<4x64xf32>
    %209 = arith.mulf %200, %182 : vector<4x64xf32>
    %210 = arith.mulf %199, %202 : vector<4x64xf32>
    %211 = arith.addf %209, %210 : vector<4x64xf32>
    %212 = math.tanh %211 : vector<4x64xf32>
    %213 = arith.mulf %208, %212 : vector<4x64xf32>
    %c7 = arith.constant 7 : index
    %c0_80 = arith.constant 0 : index
    %c0_81 = arith.constant 0 : index
    %214 = vector.load %arg0[%c7, %c0_80, %c0_81] : memref<8x4x2xf32, #tpu.memory_space<vmem>>, vector<1x4x2xf32>
    %215 = vector.shape_cast %214 : vector<1x4x2xf32> to vector<4x2xf32>
    %c0_82 = arith.constant 0 : index
    %c0_83 = arith.constant 0 : index
    %216 = vector.load %arg2[%c0_82, %c0_83] : memref<2x256xf32, #tpu.memory_space<vmem>>, vector<2x256xf32>
    %cst_84 = arith.constant dense<0.000000e+00> : vector<4x256xf32>
    %217 = tpu.matmul %215, %216, %cst_84 {dimension_numbers = #tpu.dot_dimension_numbers<[1], [0], [0], [1], [0, 0, 1, 1], [], []>} : vector<4x2xf32>, vector<2x256xf32>, vector<4x256xf32> -> vector<4x256xf32>
    %218 = arith.addf %217, %8 : vector<4x256xf32>
    %c0_85 = arith.constant 0 : index
    %c0_86 = arith.constant 0 : index
    %219 = vector.load %arg4[%c0_85, %c0_86] : memref<64x256xf32, #tpu.memory_space<vmem>>, vector<64x256xf32>
    %cst_87 = arith.constant dense<0.000000e+00> : vector<4x256xf32>
    %220 = tpu.matmul %213, %219, %cst_87 {dimension_numbers = #tpu.dot_dimension_numbers<[1], [0], [0], [1], [0, 0, 1, 1], [], []>} : vector<4x64xf32>, vector<64x256xf32>, vector<4x256xf32> -> vector<4x256xf32>
    %221 = arith.addf %218, %220 : vector<4x256xf32>
    %222 = vector.extract_strided_slice %221 {offsets = [0, 0], sizes = [4, 128], strides = [1, 1]} : vector<4x256xf32> to vector<4x128xf32>
    %223 = arith.negf %222 : vector<4x128xf32>
    %224 = math.exp %223 : vector<4x128xf32>
    %cst_88 = arith.constant 1.000000e+00 : f32
    %225 = vector.broadcast %cst_88 : f32 to vector<4x128xf32>
    %226 = arith.addf %225, %224 : vector<4x128xf32>
    %227 = arith.divf %225, %226 : vector<4x128xf32>
    %228 = vector.extract_strided_slice %227 {offsets = [0, 0], sizes = [4, 64], strides = [1, 1]} : vector<4x128xf32> to vector<4x64xf32>
    %229 = vector.extract_strided_slice %227 {offsets = [0, 64], sizes = [4, 64], strides = [1, 1]} : vector<4x128xf32> to vector<4x64xf32>
    %230 = vector.extract_strided_slice %221 {offsets = [0, 128], sizes = [4, 64], strides = [1, 1]} : vector<4x256xf32> to vector<4x64xf32>
    %231 = math.tanh %230 : vector<4x64xf32>
    %232 = vector.extract_strided_slice %221 {offsets = [0, 192], sizes = [4, 64], strides = [1, 1]} : vector<4x256xf32> to vector<4x64xf32>
    %233 = arith.negf %232 : vector<4x64xf32>
    %234 = math.exp %233 : vector<4x64xf32>
    %cst_89 = arith.constant 1.000000e+00 : f32
    %235 = vector.broadcast %cst_89 : f32 to vector<4x64xf32>
    %236 = arith.addf %235, %234 : vector<4x64xf32>
    %237 = arith.divf %235, %236 : vector<4x64xf32>
    %238 = arith.mulf %229, %211 : vector<4x64xf32>
    %239 = arith.mulf %228, %231 : vector<4x64xf32>
    %240 = arith.addf %238, %239 : vector<4x64xf32>
    %241 = math.tanh %240 : vector<4x64xf32>
    %242 = arith.mulf %237, %241 : vector<4x64xf32>
    %c0_90 = arith.constant 0 : index
    %c0_91 = arith.constant 0 : index
    %243 = vector.load %arg5[%c0_90, %c0_91] : memref<64x1xf32, #tpu.memory_space<vmem>>, vector<64x1xf32>
    %cst_92 = arith.constant dense<0.000000e+00> : vector<4x1xf32>
    %244 = tpu.matmul %242, %243, %cst_92 {dimension_numbers = #tpu.dot_dimension_numbers<[1], [0], [0], [1], [0, 0, 1, 1], [], []>} : vector<4x64xf32>, vector<64x1xf32>, vector<4x1xf32> -> vector<4x1xf32>
    %245 = arith.addf %244, %5 : vector<4x1xf32>
    %cst_93 = arith.constant 0.00999999977 : f32
    %cst_94 = arith.constant 0.000000e+00 : f32
    %246 = vector.broadcast %cst_94 : f32 to vector<4x1xf32>
    %247 = arith.cmpf oge, %245, %246 : vector<4x1xf32>
    %248 = vector.broadcast %cst_93 : f32 to vector<4x1xf32>
    %249 = arith.mulf %248, %245 : vector<4x1xf32>
    %250 = arith.select %247, %245, %249 : vector<4x1xi1>, vector<4x1xf32>
    %c0_95 = arith.constant 0 : index
    %c0_96 = arith.constant 0 : index
    %251 = vector.load %arg8[%c0_95, %c0_96] : memref<4x1xf32, #tpu.memory_space<vmem>>, vector<4x1xf32>
    tpu.vector_store %arg8[%c0_95, %c0_96], %250 {strides = array<i32>} : memref<4x1xf32, #tpu.memory_space<vmem>>, vector<4x1xf32>,
    return
  }
}

</mosaic_0001>

<llo_original>
// kernel: tpu_custom_call.1
$region0: #{tpu_custom_call.1}
  #allocation0 [shape = 'u32[]', space=smem, size = 0x4, offset = 0x4, fixed_abs, tag = 'smem constant byte address 0x4 - core index']
  #allocation1 [shape = 'u32[144,128]{1,0:T(1,128)}', space=vmem, size = 0x12000, scoped, tag = 'internal scratch']
  #allocation2 [shape = 'f32[1,1]{1,0:T(1,128)S(1)}', space=vmem, size = 0x200, scoped, tag = 'scoped memory for tpu_custom_call.1']
  %s0 = inlined_call_operand.vmem [shape: f32[8,4,2], index: 0, kind: input, shape index: {}]
  %s1 = inlined_call_operand.vmem [shape: f32[4,256], index: 1, kind: input, shape index: {}]
  %s2 = inlined_call_operand.vmem [shape: f32[2,256], index: 2, kind: input, shape index: {}]
  %s3 = inlined_call_operand.vmem [shape: f32[1,256], index: 3, kind: input, shape index: {}]
  %s4 = inlined_call_operand.vmem [shape: f32[64,256], index: 4, kind: input, shape index: {}]
  %s5 = inlined_call_operand.vmem [shape: f32[64,1], index: 5, kind: input, shape index: {}]
  %s6 = inlined_call_operand.vmem [shape: f32[256,1], index: 6, kind: input, shape index: {}]
  %s7 = inlined_call_operand.<no memory space> [shape: f32[1,1], index: 7, kind: input, shape index: {}]
  %s8 = inlined_call_operand.vmem [shape: f32[4,1], index: 8, kind: output, shape index: {}]
  %s9 = sld [smem:[#allocation0]]
  $region42: #{tpu_custom_call.1} parent=0
    _
  %s11 = ssub.s32 1, %s9
  %s12 = scalar_select 0, %s11, %s9
  %v13 = vstv %s7
  %14 = vst [vmem:[#allocation2] sm:$0x1] %v13
  // Predicated region
  $region2: #{tpu_custom_call.1} parent=0 // pred_check
    _
  $region3: #{tpu_custom_call.1} parent=0 // pred_check_branch
    %16 = sbr.rel (0) target = $region5
  $region4: #{tpu_custom_call.1} parent=0 // pred_region
    _
  $region5: #{tpu_custom_call.1} parent=0 // pred_fallthru
    _
  // Predicated region
  $region6: #{tpu_custom_call.1} parent=0 // pred_check
    _
  $region7: #{tpu_custom_call.1} parent=0 // pred_check_branch
    %18 = sbr.rel (0) target = $region9
  $region8: #{tpu_custom_call.1} parent=0 // pred_region
    _
  $region9: #{tpu_custom_call.1} parent=0 // pred_fallthru
    _
  // Predicated region
  $region10: #{tpu_custom_call.1} parent=0 // pred_check
    _
  $region11: #{tpu_custom_call.1} parent=0 // pred_check_branch
    %20 = sbr.rel (0) target = $region13
  $region12: #{tpu_custom_call.1} parent=0 // pred_region
    _
  $region13: #{tpu_custom_call.1} parent=0 // pred_fallthru
    _
  // Predicated region
  $region14: #{tpu_custom_call.1} parent=0 // pred_check
    _
  $region15: #{tpu_custom_call.1} parent=0 // pred_check_branch
    %22 = sbr.rel (0) target = $region17
  $region16: #{tpu_custom_call.1} parent=0 // pred_region
    _
  $region17: #{tpu_custom_call.1} parent=0 // pred_fallthru
    _
  // Predicated region
  $region18: #{tpu_custom_call.1} parent=0 // pred_check
    _
  $region19: #{tpu_custom_call.1} parent=0 // pred_check_branch
    %24 = sbr.rel (0) target = $region21
  $region20: #{tpu_custom_call.1} parent=0 // pred_region
    _
  $region21: #{tpu_custom_call.1} parent=0 // pred_fallthru
    _
  // Predicated region
  $region22: #{tpu_custom_call.1} parent=0 // pred_check
    _
  $region23: #{tpu_custom_call.1} parent=0 // pred_check_branch
    %26 = sbr.rel (0) target = $region25
  $region24: #{tpu_custom_call.1} parent=0 // pred_region
    _
  $region25: #{tpu_custom_call.1} parent=0 // pred_fallthru
    _
  // Predicated region
  $region26: #{tpu_custom_call.1} parent=0 // pred_check
    _
  $region27: #{tpu_custom_call.1} parent=0 // pred_check_branch
    %28 = sbr.rel (0) target = $region29
  $region28: #{tpu_custom_call.1} parent=0 // pred_region
    _
  $region29: #{tpu_custom_call.1} parent=0 // pred_fallthru
    _
  // Predicated region
  $region30: #{tpu_custom_call.1} parent=0 // pred_check
    _
  $region31: #{tpu_custom_call.1} parent=0 // pred_check_branch
    %30 = sbr.rel (0) target = $region33
  $region32: #{tpu_custom_call.1} parent=0 // pred_region
    _
  $region33: #{tpu_custom_call.1} parent=0 // pred_fallthru
    _
  %v31 = vld [vmem:[%s1] sm:$0xff]
  %v32 = vld [vmem:[%s6] sm:$0xff]
  %v33 = vld [vmem:[%s6 + $0x8] sm:$0xff]
  %v34 = vld [vmem:[%s6 + $0x10] sm:$0xff]
  %v35 = vld [vmem:[%s6 + $0x18] sm:$0xff]
  %v36 = vld [vmem:[%s6 + $0x20] sm:$0xff]
  %v37 = vld [vmem:[%s6 + $0x28] sm:$0xff]
  %v38 = vld [vmem:[%s6 + $0x30] sm:$0xff]
  %v39 = vld [vmem:[%s6 + $0x38] sm:$0xff]
  %v40 = vld [vmem:[%s6 + $0x40] sm:$0xff]
  %v41 = vld [vmem:[%s6 + $0x48] sm:$0xff]
  %v42 = vld [vmem:[%s6 + $0x50] sm:$0xff]
  %v43 = vld [vmem:[%s6 + $0x58] sm:$0xff]
  %v44 = vld [vmem:[%s6 + $0x60] sm:$0xff]
  %v45 = vld [vmem:[%s6 + $0x68] sm:$0xff]
  %v46 = vld [vmem:[%s6 + $0x70] sm:$0xff]
  %v47 = vld [vmem:[%s6 + $0x78] sm:$0xff]
  %v48 = vld [vmem:[%s6 + $0x80] sm:$0xff]
  %v49 = vld [vmem:[%s6 + $0x88] sm:$0xff]
  %v50 = vld [vmem:[%s6 + $0x90] sm:$0xff]
  %v51 = vld [vmem:[%s6 + $0x98] sm:$0xff]
  %v52 = vld [vmem:[%s6 + $0xa0] sm:$0xff]
  %v53 = vld [vmem:[%s6 + $0xa8] sm:$0xff]
  %v54 = vld [vmem:[%s6 + $0xb0] sm:$0xff]
  %v55 = vld [vmem:[%s6 + $0xb8] sm:$0xff]
  %v56 = vld [vmem:[%s6 + $0xc0] sm:$0xff]
  %v57 = vld [vmem:[%s6 + $0xc8] sm:$0xff]
  %v58 = vld [vmem:[%s6 + $0xd0] sm:$0xff]
  %v59 = vld [vmem:[%s6 + $0xd8] sm:$0xff]
  %v60 = vld [vmem:[%s6 + $0xe0] sm:$0xff]
  %v61 = vld [vmem:[%s6 + $0xe8] sm:$0xff]
  %v62 = vld [vmem:[%s6 + $0xf0] sm:$0xff]
  %v63 = vld [vmem:[%s6 + $0xf8] sm:$0xff]
  %v64 = vld [vmem:[#allocation2] sm:$0x1]
  %v66 = vlaneseq
  %v67 = vshrl.u32 %v66, 7
  %v68 = vsub.s32 0, %v67
  %v69 = vrot.slane %v64, %v68
  %v72 = vcombine.high %v31, %v31
  %74 = vmatprep.subr.mxu0 0.0
  %75 = vmatpush1.msra.mxu0 %v32
  %76 = vmatprep.subr.mxu0 0.0
  %77 = vmatpush1.msra.mxu0 %v33
  %78 = vmatprep.subr.mxu0 0.0
  %79 = vmatpush1.msra.mxu0 %v34
  %80 = vmatprep.subr.mxu0 0.0
  %81 = vmatpush1.msra.mxu0 %v35
  %82 = vmatprep.subr.mxu0 0.0
  %83 = vmatpush1.msra.mxu0 %v36
  %84 = vmatprep.subr.mxu0 0.0
  %85 = vmatpush1.msra.mxu0 %v37
  %86 = vmatprep.subr.mxu0 0.0
  %87 = vmatpush1.msra.mxu0 %v38
  %88 = vmatprep.subr.mxu0 0.0
  %89 = vmatpush1.msra.mxu0 %v39
  %90 = vmatprep.subr.mxu0 0.0
  %91 = vmatpush1.msra.mxu0 %v40
  %92 = vmatprep.subr.mxu0 0.0
  %93 = vmatpush1.msra.mxu0 %v41
  %94 = vmatprep.subr.mxu0 0.0
  %95 = vmatpush1.msra.mxu0 %v42
  %96 = vmatprep.subr.mxu0 0.0
  %97 = vmatpush1.msra.mxu0 %v43
  %98 = vmatprep.subr.mxu0 0.0
  %99 = vmatpush1.msra.mxu0 %v44
  %100 = vmatprep.subr.mxu0 0.0
  %101 = vmatpush1.msra.mxu0 %v45
  %102 = vmatprep.subr.mxu0 0.0
  %103 = vmatpush1.msra.mxu0 %v46
  %104 = vmatprep.subr.mxu0 0.0
  %105 = vmatpush1.msra.mxu0 %v47
  %106 = vmatprep.subr.mxu0 0.0
  %107 = vmatpush1.msra.mxu0 %v48
  %108 = vmatprep.subr.mxu0 0.0
  %109 = vmatpush1.msra.mxu0 %v49
  %110 = vmatprep.subr.mxu0 0.0
  %111 = vmatpush1.msra.mxu0 %v50
  %112 = vmatprep.subr.mxu0 0.0
  %113 = vmatpush1.msra.mxu0 %v51
  %114 = vmatprep.subr.mxu0 0.0
  %115 = vmatpush1.msra.mxu0 %v52
  %116 = vmatprep.subr.mxu0 0.0
  %117 = vmatpush1.msra.mxu0 %v53
  %118 = vmatprep.subr.mxu0 0.0
  %119 = vmatpush1.msra.mxu0 %v54
  %120 = vmatprep.subr.mxu0 0.0
  %121 = vmatpush1.msra.mxu0 %v55
  %122 = vmatprep.subr.mxu0 0.0
  %123 = vmatpush1.msra.mxu0 %v56
  %124 = vmatprep.subr.mxu0 0.0
  %125 = vmatpush1.msra.mxu0 %v57
  %126 = vmatprep.subr.mxu0 0.0
  %127 = vmatpush1.msra.mxu0 %v58
  %128 = vmatprep.subr.mxu0 0.0
  %129 = vmatpush1.msra.mxu0 %v59
  %130 = vmatprep.subr.mxu0 0.0
  %131 = vmatpush1.msra.mxu0 %v60
  %132 = vmatprep.subr.mxu0 0.0
  %133 = vmatpush1.msra.mxu0 %v61
  %134 = vmatprep.subr.mxu0 0.0
  %135 = vmatpush1.msra.mxu0 %v62
  %136 = vmatprep.subr.mxu0 0.0
  %137 = vmatpush1.msra.mxu0 %v63
  %138 = vmatprep.mubr.f32.mxu0 %v72
  %139 = vmatmul.mubr.f32.gmra.mrb[0].mxu0 %v31
  %v140 = vpop.f32.mrb[0].mxu0
  %v141 = vadd.f32 %v69, %v140
  %v142 = vpop.f32.mrb[0].mxu0
  %143 = vdwg.mxu0
  %v144 = vld [vmem:[%s3] sm:$0x3]
  %v146 = vlaneseq
  %v147 = vshrl.u32 %v146, 7
  %v148 = vsub.s32 0, %v147
  %v149 = vrot.slane %v144, %v148
  %v150 = vlaneseq
  %v151 = vshrl.u32 %v150, 7
  %v152 = vsub.s32 1, %v151
  %v153 = vrot.slane %v144, %v152
  %v156 = vld [vmem:[%s0] sm:$0xf]
  %v157 = vld [vmem:[%s2] sm:$0xf]
  %v160 = vunpack.c.l.s4 1983009808
  %v161 = vunpack.c.0.s8 %v160
  %v162 = vlaneseq
  %v163 = vshrl.u32 %v162, 7
  %v164 = vsub.s32 %v161, %v163
  %v165 = vrot.slane %v157, %v164
  %v166 = vcombine.high %v165, %v165
  %vm167 = vcmask 15360
  %v169 = vsel %vm167, %v156, 0
  %vm171 = vcmask 1041408
  %v172 = vsel %vm171, %v165, 0
  %v174 = vsel %vm171, %v166, 0
  %176 = vmatprep.subr.mxu0 %v174
  %177 = vmatpush1.msra.mxu0 %v172
  %178 = vmatprep.subr.mxu0 0.0
  %179 = vmatpush1.msra.mxu0 0.0
  %180 = vmatprep.subr.mxu0 0.0
  %181 = vmatpush1.msra.mxu0 0.0
  %182 = vmatprep.subr.mxu0 0.0
  %183 = vmatpush1.msra.mxu0 0.0
  %184 = vmatprep.subr.mxu0 0.0
  %185 = vmatpush1.msra.mxu0 0.0
  %186 = vmatprep.subr.mxu0 0.0
  %187 = vmatpush1.msra.mxu0 0.0
  %188 = vmatprep.subr.mxu0 0.0
  %189 = vmatpush1.msra.mxu0 0.0
  %190 = vmatprep.subr.mxu0 0.0
  %191 = vmatpush1.msra.mxu0 0.0
  %192 = vmatprep.subr.mxu0 0.0
  %193 = vmatpush1.msra.mxu0 0.0
  %194 = vmatprep.subr.mxu0 0.0
  %195 = vmatpush1.msra.mxu0 0.0
  %196 = vmatprep.subr.mxu0 0.0
  %197 = vmatpush1.msra.mxu0 0.0
  %198 = vmatprep.subr.mxu0 0.0
  %199 = vmatpush1.msra.mxu0 0.0
  %200 = vmatprep.subr.mxu0 0.0
  %201 = vmatpush1.msra.mxu0 0.0
  %202 = vmatprep.subr.mxu0 0.0
  %203 = vmatpush1.msra.mxu0 0.0
  %204 = vmatprep.subr.mxu0 0.0
  %205 = vmatpush1.msra.mxu0 0.0
  %206 = vmatprep.subr.mxu0 0.0
  %207 = vmatpush1.msra.mxu0 0.0
  %208 = vmatprep.subr.mxu0 0.0
  %209 = vmatpush1.msra.mxu0 0.0
  %210 = vmatprep.subr.mxu0 0.0
  %211 = vmatpush1.msra.mxu0 0.0
  %212 = vmatprep.subr.mxu0 0.0
  %213 = vmatpush1.msra.mxu0 0.0
  %214 = vmatprep.subr.mxu0 0.0
  %215 = vmatpush1.msra.mxu0 0.0
  %216 = vmatprep.subr.mxu0 0.0
  %217 = vmatpush1.msra.mxu0 0.0
  %218 = vmatprep.subr.mxu0 0.0
  %219 = vmatpush1.msra.mxu0 0.0
  %220 = vmatprep.subr.mxu0 0.0
  %221 = vmatpush1.msra.mxu0 0.0
  %222 = vmatprep.subr.mxu0 0.0
  %223 = vmatpush1.msra.mxu0 0.0
  %224 = vmatprep.subr.mxu0 0.0
  %225 = vmatpush1.msra.mxu0 0.0
  %226 = vmatprep.subr.mxu0 0.0
  %227 = vmatpush1.msra.mxu0 0.0
  %228 = vmatprep.subr.mxu0 0.0
  %229 = vmatpush1.msra.mxu0 0.0
  %230 = vmatprep.subr.mxu0 0.0
  %231 = vmatpush1.msra.mxu0 0.0
  %232 = vmatprep.subr.mxu0 0.0
  %233 = vmatpush1.msra.mxu0 0.0
  %234 = vmatprep.subr.mxu0 0.0
  %235 = vmatpush1.msra.mxu0 0.0
  %236 = vmatprep.subr.mxu0 0.0
  %237 = vmatpush1.msra.mxu0 0.0
  %238 = vmatprep.subr.mxu0 0.0
  %239 = vmatpush1.msra.mxu0 0.0
  %240 = vmatprep.mubr.f32.mxu0 0.0
  %241 = vmatmul.mubr.f32.gmra.mrb[0].mxu0 %v169
  %v242 = vpop.f32.mrb[0].mxu0
  %v243 = vadd.f32 %v149, %v242
  %v244 = vpop.f32.mrb[0].mxu0
  %v245 = vadd.f32 %v153, %v244
  %246 = vdwg.mxu0
  %v247 = vld [vmem:[%s4] sm:$0xff]
  %v248 = vld [vmem:[%s4 + $0x8] sm:$0xff]
  %v249 = vld [vmem:[%s4 + $0x10] sm:$0xff]
  %v250 = vld [vmem:[%s4 + $0x18] sm:$0xff]
  %v251 = vld [vmem:[%s4 + $0x20] sm:$0xff]
  %v252 = vld [vmem:[%s4 + $0x28] sm:$0xff]
  %v253 = vld [vmem:[%s4 + $0x30] sm:$0xff]
  %v254 = vld [vmem:[%s4 + $0x38] sm:$0xff]
  %v255 = vld [vmem:[%s4 + $0x40] sm:$0xff]
  %v256 = vld [vmem:[%s4 + $0x48] sm:$0xff]
  %v257 = vld [vmem:[%s4 + $0x50] sm:$0xff]
  %v258 = vld [vmem:[%s4 + $0x58] sm:$0xff]
  %v259 = vld [vmem:[%s4 + $0x60] sm:$0xff]
  %v260 = vld [vmem:[%s4 + $0x68] sm:$0xff]
  %v261 = vld [vmem:[%s4 + $0x70] sm:$0xff]
  %v262 = vld [vmem:[%s4 + $0x78] sm:$0xff]
  %vm263 = vcmask 523264
  %v265 = vsel %vm263, 0.0, 0
  %267 = vmatprep.subr.mxu0 %v248
  %268 = vmatpush1.msra.mxu0 %v247
  %269 = vmatprep.subr.mxu0 %v250
  %270 = vmatpush1.msra.mxu0 %v249
  %271 = vmatprep.subr.mxu0 %v252
  %272 = vmatpush1.msra.mxu0 %v251
  %273 = vmatprep.subr.mxu0 %v254
  %274 = vmatpush1.msra.mxu0 %v253
  %275 = vmatprep.subr.mxu0 %v256
  %276 = vmatpush1.msra.mxu0 %v255
  %277 = vmatprep.subr.mxu0 %v258
  %278 = vmatpush1.msra.mxu0 %v257
  %279 = vmatprep.subr.mxu0 %v260
  %280 = vmatpush1.msra.mxu0 %v259
  %281 = vmatprep.subr.mxu0 %v262
  %282 = vmatpush1.msra.mxu0 %v261
  %283 = vmatprep.subr.mxu0 0.0
  %284 = vmatpush1.msra.mxu0 0.0
  %285 = vmatprep.subr.mxu0 0.0
  %286 = vmatpush1.msra.mxu0 0.0
  %287 = vmatprep.subr.mxu0 0.0
  %288 = vmatpush1.msra.mxu0 0.0
  %289 = vmatprep.subr.mxu0 0.0
  %290 = vmatpush1.msra.mxu0 0.0
  %291 = vmatprep.subr.mxu0 0.0
  %292 = vmatpush1.msra.mxu0 0.0
  %293 = vmatprep.subr.mxu0 0.0
  %294 = vmatpush1.msra.mxu0 0.0
  %295 = vmatprep.subr.mxu0 0.0
  %296 = vmatpush1.msra.mxu0 0.0
  %297 = vmatprep.subr.mxu0 0.0
  %298 = vmatpush1.msra.mxu0 0.0
  %299 = vmatprep.subr.mxu0 0.0
  %300 = vmatpush1.msra.mxu0 0.0
  %301 = vmatprep.subr.mxu0 0.0
  %302 = vmatpush1.msra.mxu0 0.0
  %303 = vmatprep.subr.mxu0 0.0
  %304 = vmatpush1.msra.mxu0 0.0
  %305 = vmatprep.subr.mxu0 0.0
  %306 = vmatpush1.msra.mxu0 0.0
  %307 = vmatprep.subr.mxu0 0.0
  %308 = vmatpush1.msra.mxu0 0.0
  %309 = vmatprep.subr.mxu0 0.0
  %310 = vmatpush1.msra.mxu0 0.0
  %311 = vmatprep.subr.mxu0 0.0
  %312 = vmatpush1.msra.mxu0 0.0
  %313 = vmatprep.subr.mxu0 0.0
  %314 = vmatpush1.msra.mxu0 0.0
  %315 = vmatprep.subr.mxu0 0.0
  %316 = vmatpush1.msra.mxu0 0.0
  %317 = vmatprep.subr.mxu0 0.0
  %318 = vmatpush1.msra.mxu0 0.0
  %319 = vmatprep.subr.mxu0 0.0
  %320 = vmatpush1.msra.mxu0 0.0
  %321 = vmatprep.subr.mxu0 0.0
  %322 = vmatpush1.msra.mxu0 0.0
  %323 = vmatprep.subr.mxu0 0.0
  %324 = vmatpush1.msra.mxu0 0.0
  %325 = vmatprep.subr.mxu0 0.0
  %326 = vmatpush1.msra.mxu0 0.0
  %327 = vmatprep.subr.mxu0 0.0
  %328 = vmatpush1.msra.mxu0 0.0
  %329 = vmatprep.subr.mxu0 0.0
  %330 = vmatpush1.msra.mxu0 0.0
  %331 = vmatprep.mubr.f32.mxu0 0.0
  %332 = vmatmul.mubr.f32.gmra.mrb[0].mxu0 %v265
  %v333 = vpop.f32.mrb[0].mxu0
  %v334 = vadd.f32 0.0, %v333
  %v335 = vpop.f32.mrb[0].mxu0
  %v336 = vadd.f32 0.0, %v335
  %337 = vdwg.mxu0
  %v338 = vadd.f32 %v243, %v334
  %v339 = vadd.f32 %v245, %v336
  %v340 = vxor.u32 %v338, 2147483648
  %v341 = vmul.f32 %v340, 1.442695
  %v342 = vpow.pop %v341
  %v343 = vadd.f32 %v342, 1.0
  %v344 = vrcp.pop %v343
  %v345 = vmul.f32 1.0, %v344
  %v346 = vtanh.pop %v339
  %v347 = vxor.u32 %v339, 2147483648
  %v348 = vmul.f32 %v347, 1.442695
  %v349 = vpow.pop %v348
  %v350 = vadd.f32 %v349, 1.0
  %v351 = vrcp.pop %v350
  %v352 = vmul.f32 1.0, %v351
  %v353 = vmul.f32 %v345, 0.0
  %v354 = vmul.f32 %v345, %v346
  %356 = vrot.lane.b32.xlu0 %v354, 64
  %v357 = vpop.permute.xlu0 %356
  %v359 = vadd.f32 %v353, %v357
  %v360 = vtanh.pop %v359
  %v361 = vmul.f32 %v352, %v360
  %s362 = scalar_lea.vmem %s0, 4
  %v363 = vld [vmem:[%s362] sm:$0xf]
  %v365 = vsel %vm167, %v363, 0
  %367 = vmatprep.subr.mxu0 %v174
  %368 = vmatpush1.msra.mxu0 %v172
  %369 = vmatprep.subr.mxu0 0.0
  %370 = vmatpush1.msra.mxu0 0.0
  %371 = vmatprep.subr.mxu0 0.0
  %372 = vmatpush1.msra.mxu0 0.0
  %373 = vmatprep.subr.mxu0 0.0
  %374 = vmatpush1.msra.mxu0 0.0
  %375 = vmatprep.subr.mxu0 0.0
  %376 = vmatpush1.msra.mxu0 0.0
  %377 = vmatprep.subr.mxu0 0.0
  %378 = vmatpush1.msra.mxu0 0.0
  %379 = vmatprep.subr.mxu0 0.0
  %380 = vmatpush1.msra.mxu0 0.0
  %381 = vmatprep.subr.mxu0 0.0
  %382 = vmatpush1.msra.mxu0 0.0
  %383 = vmatprep.subr.mxu0 0.0
  %384 = vmatpush1.msra.mxu0 0.0
  %385 = vmatprep.subr.mxu0 0.0
  %386 = vmatpush1.msra.mxu0 0.0
  %387 = vmatprep.subr.mxu0 0.0
  %388 = vmatpush1.msra.mxu0 0.0
  %389 = vmatprep.subr.mxu0 0.0
  %390 = vmatpush1.msra.mxu0 0.0
  %391 = vmatprep.subr.mxu0 0.0
  %392 = vmatpush1.msra.mxu0 0.0
  %393 = vmatprep.subr.mxu0 0.0
  %394 = vmatpush1.msra.mxu0 0.0
  %395 = vmatprep.subr.mxu0 0.0
  %396 = vmatpush1.msra.mxu0 0.0
  %397 = vmatprep.subr.mxu0 0.0
  %398 = vmatpush1.msra.mxu0 0.0
  %399 = vmatprep.subr.mxu0 0.0
  %400 = vmatpush1.msra.mxu0 0.0
  %401 = vmatprep.subr.mxu0 0.0
  %402 = vmatpush1.msra.mxu0 0.0
  %403 = vmatprep.subr.mxu0 0.0
  %404 = vmatpush1.msra.mxu0 0.0
  %405 = vmatprep.subr.mxu0 0.0
  %406 = vmatpush1.msra.mxu0 0.0
  %407 = vmatprep.subr.mxu0 0.0
  %408 = vmatpush1.msra.mxu0 0.0
  %409 = vmatprep.subr.mxu0 0.0
  %410 = vmatpush1.msra.mxu0 0.0
  %411 = vmatprep.subr.mxu0 0.0
  %412 = vmatpush1.msra.mxu0 0.0
  %413 = vmatprep.subr.mxu0 0.0
  %414 = vmatpush1.msra.mxu0 0.0
  %415 = vmatprep.subr.mxu0 0.0
  %416 = vmatpush1.msra.mxu0 0.0
  %417 = vmatprep.subr.mxu0 0.0
  %418 = vmatpush1.msra.mxu0 0.0
  %419 = vmatprep.subr.mxu0 0.0
  %420 = vmatpush1.msra.mxu0 0.0
  %421 = vmatprep.subr.mxu0 0.0
  %422 = vmatpush1.msra.mxu0 0.0
  %423 = vmatprep.subr.mxu0 0.0
  %424 = vmatpush1.msra.mxu0 0.0
  %425 = vmatprep.subr.mxu0 0.0
  %426 = vmatpush1.msra.mxu0 0.0
  %427 = vmatprep.subr.mxu0 0.0
  %428 = vmatpush1.msra.mxu0 0.0
  %429 = vmatprep.subr.mxu0 0.0
  %430 = vmatpush1.msra.mxu0 0.0
  %431 = vmatprep.mubr.f32.mxu0 0.0
  %432 = vmatmul.mubr.f32.gmra.mrb[0].mxu0 %v365
  %v433 = vpop.f32.mrb[0].mxu0
  %v434 = vadd.f32 %v149, %v433
  %v435 = vpop.f32.mrb[0].mxu0
  %v436 = vadd.f32 %v153, %v435
  %437 = vdwg.mxu0
  %439 = vrot.lane.b32.xlu0 %v361, 64
  %v440 = vpop.permute.xlu0 %439
  %v441 = vsel %vm263, %v440, 0
  %443 = vmatprep.subr.mxu0 %v248
  %444 = vmatpush1.msra.mxu0 %v247
  %445 = vmatprep.subr.mxu0 %v250
  %446 = vmatpush1.msra.mxu0 %v249
  %447 = vmatprep.subr.mxu0 %v252
  %448 = vmatpush1.msra.mxu0 %v251
  %449 = vmatprep.subr.mxu0 %v254
  %450 = vmatpush1.msra.mxu0 %v253
  %451 = vmatprep.subr.mxu0 %v256
  %452 = vmatpush1.msra.mxu0 %v255
  %453 = vmatprep.subr.mxu0 %v258
  %454 = vmatpush1.msra.mxu0 %v257
  %455 = vmatprep.subr.mxu0 %v260
  %456 = vmatpush1.msra.mxu0 %v259
  %457 = vmatprep.subr.mxu0 %v262
  %458 = vmatpush1.msra.mxu0 %v261
  %459 = vmatprep.subr.mxu0 0.0
  %460 = vmatpush1.msra.mxu0 0.0
  %461 = vmatprep.subr.mxu0 0.0
  %462 = vmatpush1.msra.mxu0 0.0
  %463 = vmatprep.subr.mxu0 0.0
  %464 = vmatpush1.msra.mxu0 0.0
  %465 = vmatprep.subr.mxu0 0.0
  %466 = vmatpush1.msra.mxu0 0.0
  %467 = vmatprep.subr.mxu0 0.0
  %468 = vmatpush1.msra.mxu0 0.0
  %469 = vmatprep.subr.mxu0 0.0
  %470 = vmatpush1.msra.mxu0 0.0
  %471 = vmatprep.subr.mxu0 0.0
  %472 = vmatpush1.msra.mxu0 0.0
  %473 = vmatprep.subr.mxu0 0.0
  %474 = vmatpush1.msra.mxu0 0.0
  %475 = vmatprep.subr.mxu0 0.0
  %476 = vmatpush1.msra.mxu0 0.0
  %477 = vmatprep.subr.mxu0 0.0
  %478 = vmatpush1.msra.mxu0 0.0
  %479 = vmatprep.subr.mxu0 0.0
  %480 = vmatpush1.msra.mxu0 0.0
  %481 = vmatprep.subr.mxu0 0.0
  %482 = vmatpush1.msra.mxu0 0.0
  %483 = vmatprep.subr.mxu0 0.0
  %484 = vmatpush1.msra.mxu0 0.0
  %485 = vmatprep.subr.mxu0 0.0
  %486 = vmatpush1.msra.mxu0 0.0
  %487 = vmatprep.subr.mxu0 0.0
  %488 = vmatpush1.msra.mxu0 0.0
  %489 = vmatprep.subr.mxu0 0.0
  %490 = vmatpush1.msra.mxu0 0.0
  %491 = vmatprep.subr.mxu0 0.0
  %492 = vmatpush1.msra.mxu0 0.0
  %493 = vmatprep.subr.mxu0 0.0
  %494 = vmatpush1.msra.mxu0 0.0
  %495 = vmatprep.subr.mxu0 0.0
  %496 = vmatpush1.msra.mxu0 0.0
  %497 = vmatprep.subr.mxu0 0.0
  %498 = vmatpush1.msra.mxu0 0.0
  %499 = vmatprep.subr.mxu0 0.0
  %500 = vmatpush1.msra.mxu0 0.0
  %501 = vmatprep.subr.mxu0 0.0
  %502 = vmatpush1.msra.mxu0 0.0
  %503 = vmatprep.subr.mxu0 0.0
  %504 = vmatpush1.msra.mxu0 0.0
  %505 = vmatprep.subr.mxu0 0.0
  %506 = vmatpush1.msra.mxu0 0.0
  %507 = vmatprep.mubr.f32.mxu0 0.0
  %508 = vmatmul.mubr.f32.gmra.mrb[0].mxu0 %v441
  %v509 = vpop.f32.mrb[0].mxu0
  %v510 = vadd.f32 0.0, %v509
  %v511 = vpop.f32.mrb[0].mxu0
  %v512 = vadd.f32 0.0, %v511
  %513 = vdwg.mxu0
  %v514 = vadd.f32 %v434, %v510
  %v515 = vadd.f32 %v436, %v512
  %v516 = vxor.u32 %v514, 2147483648
  %v517 = vmul.f32 %v516, 1.442695
  %v518 = vpow.pop %v517
  %v519 = vadd.f32 %v518, 1.0
  %v520 = vrcp.pop %v519
  %v521 = vmul.f32 1.0, %v520
  %v522 = vtanh.pop %v515
  %v523 = vxor.u32 %v515, 2147483648
  %v524 = vmul.f32 %v523, 1.442695
  %v525 = vpow.pop %v524
  %v526 = vadd.f32 %v525, 1.0
  %v527 = vrcp.pop %v526
  %v528 = vmul.f32 1.0, %v527
  %v529 = vmul.f32 %v521, %v359
  %v530 = vmul.f32 %v521, %v522
  %532 = vrot.lane.b32.xlu0 %v530, 64
  %v533 = vpop.permute.xlu0 %532
  %v535 = vadd.f32 %v529, %v533
  %v536 = vtanh.pop %v535
  %v537 = vmul.f32 %v528, %v536
  %s538 = scalar_lea.vmem %s0, 8
  %v539 = vld [vmem:[%s538] sm:$0xf]
  %v541 = vsel %vm167, %v539, 0
  %543 = vmatprep.subr.mxu0 %v174
  %544 = vmatpush1.msra.mxu0 %v172
  %545 = vmatprep.subr.mxu0 0.0
  %546 = vmatpush1.msra.mxu0 0.0
  %547 = vmatprep.subr.mxu0 0.0
  %548 = vmatpush1.msra.mxu0 0.0
  %549 = vmatprep.subr.mxu0 0.0
  %550 = vmatpush1.msra.mxu0 0.0
  %551 = vmatprep.subr.mxu0 0.0
  %552 = vmatpush1.msra.mxu0 0.0
  %553 = vmatprep.subr.mxu0 0.0
  %554 = vmatpush1.msra.mxu0 0.0
  %555 = vmatprep.subr.mxu0 0.0
  %556 = vmatpush1.msra.mxu0 0.0
  %557 = vmatprep.subr.mxu0 0.0
  %558 = vmatpush1.msra.mxu0 0.0
  %559 = vmatprep.subr.mxu0 0.0
  %560 = vmatpush1.msra.mxu0 0.0
  %561 = vmatprep.subr.mxu0 0.0
  %562 = vmatpush1.msra.mxu0 0.0
  %563 = vmatprep.subr.mxu0 0.0
  %564 = vmatpush1.msra.mxu0 0.0
  %565 = vmatprep.subr.mxu0 0.0
  %566 = vmatpush1.msra.mxu0 0.0
  %567 = vmatprep.subr.mxu0 0.0
  %568 = vmatpush1.msra.mxu0 0.0
  %569 = vmatprep.subr.mxu0 0.0
  %570 = vmatpush1.msra.mxu0 0.0
  %571 = vmatprep.subr.mxu0 0.0
  %572 = vmatpush1.msra.mxu0 0.0
  %573 = vmatprep.subr.mxu0 0.0
  %574 = vmatpush1.msra.mxu0 0.0
  %575 = vmatprep.subr.mxu0 0.0
  %576 = vmatpush1.msra.mxu0 0.0
  %577 = vmatprep.subr.mxu0 0.0
  %578 = vmatpush1.msra.mxu0 0.0
  %579 = vmatprep.subr.mxu0 0.0
  %580 = vmatpush1.msra.mxu0 0.0
  %581 = vmatprep.subr.mxu0 0.0
  %582 = vmatpush1.msra.mxu0 0.0
  %583 = vmatprep.subr.mxu0 0.0
  %584 = vmatpush1.msra.mxu0 0.0
  %585 = vmatprep.subr.mxu0 0.0
  %586 = vmatpush1.msra.mxu0 0.0
  %587 = vmatprep.subr.mxu0 0.0
  %588 = vmatpush1.msra.mxu0 0.0
  %589 = vmatprep.subr.mxu0 0.0
  %590 = vmatpush1.msra.mxu0 0.0
  %591 = vmatprep.subr.mxu0 0.0
  %592 = vmatpush1.msra.mxu0 0.0
  %593 = vmatprep.subr.mxu0 0.0
  %594 = vmatpush1.msra.mxu0 0.0
  %595 = vmatprep.subr.mxu0 0.0
  %596 = vmatpush1.msra.mxu0 0.0
  %597 = vmatprep.subr.mxu0 0.0
  %598 = vmatpush1.msra.mxu0 0.0
  %599 = vmatprep.subr.mxu0 0.0
  %600 = vmatpush1.msra.mxu0 0.0
  %601 = vmatprep.subr.mxu0 0.0
  %602 = vmatpush1.msra.mxu0 0.0
  %603 = vmatprep.subr.mxu0 0.0
  %604 = vmatpush1.msra.mxu0 0.0
  %605 = vmatprep.subr.mxu0 0.0
  %606 = vmatpush1.msra.mxu0 0.0
  %607 = vmatprep.mubr.f32.mxu0 0.0
  %608 = vmatmul.mubr.f32.gmra.mrb[0].mxu0 %v541
  %v609 = vpop.f32.mrb[0].mxu0
  %v610 = vadd.f32 %v149, %v609
  %v611 = vpop.f32.mrb[0].mxu0
  %v612 = vadd.f32 %v153, %v611
  %613 = vdwg.mxu0
  %615 = vrot.lane.b32.xlu0 %v537, 64
  %v616 = vpop.permute.xlu0 %615
  %v617 = vsel %vm263, %v616, 0
  %619 = vmatprep.subr.mxu0 %v248
  %620 = vmatpush1.msra.mxu0 %v247
  %621 = vmatprep.subr.mxu0 %v250
  %622 = vmatpush1.msra.mxu0 %v249
  %623 = vmatprep.subr.mxu0 %v252
  %624 = vmatpush1.msra.mxu0 %v251
  %625 = vmatprep.subr.mxu0 %v254
  %626 = vmatpush1.msra.mxu0 %v253
  %627 = vmatprep.subr.mxu0 %v256
  %628 = vmatpush1.msra.mxu0 %v255
  %629 = vmatprep.subr.mxu0 %v258
  %630 = vmatpush1.msra.mxu0 %v257
  %631 = vmatprep.subr.mxu0 %v260
  %632 = vmatpush1.msra.mxu0 %v259
  %633 = vmatprep.subr.mxu0 %v262
  %634 = vmatpush1.msra.mxu0 %v261
  %635 = vmatprep.subr.mxu0 0.0
  %636 = vmatpush1.msra.mxu0 0.0
  %637 = vmatprep.subr.mxu0 0.0
  %638 = vmatpush1.msra.mxu0 0.0
  %639 = vmatprep.subr.mxu0 0.0
  %640 = vmatpush1.msra.mxu0 0.0
  %641 = vmatprep.subr.mxu0 0.0
  %642 = vmatpush1.msra.mxu0 0.0
  %643 = vmatprep.subr.mxu0 0.0
  %644 = vmatpush1.msra.mxu0 0.0
  %645 = vmatprep.subr.mxu0 0.0
  %646 = vmatpush1.msra.mxu0 0.0
  %647 = vmatprep.subr.mxu0 0.0
  %648 = vmatpush1.msra.mxu0 0.0
  %649 = vmatprep.subr.mxu0 0.0
  %650 = vmatpush1.msra.mxu0 0.0
  %651 = vmatprep.subr.mxu0 0.0
  %652 = vmatpush1.msra.mxu0 0.0
  %653 = vmatprep.subr.mxu0 0.0
  %654 = vmatpush1.msra.mxu0 0.0
  %655 = vmatprep.subr.mxu0 0.0
  %656 = vmatpush1.msra.mxu0 0.0
  %657 = vmatprep.subr.mxu0 0.0
  %658 = vmatpush1.msra.mxu0 0.0
  %659 = vmatprep.subr.mxu0 0.0
  %660 = vmatpush1.msra.mxu0 0.0
  %661 = vmatprep.subr.mxu0 0.0
  %662 = vmatpush1.msra.mxu0 0.0
  %663 = vmatprep.subr.mxu0 0.0
  %664 = vmatpush1.msra.mxu0 0.0
  %665 = vmatprep.subr.mxu0 0.0
  %666 = vmatpush1.msra.mxu0 0.0
  %667 = vmatprep.subr.mxu0 0.0
  %668 = vmatpush1.msra.mxu0 0.0
  %669 = vmatprep.subr.mxu0 0.0
  %670 = vmatpush1.msra.mxu0 0.0
  %671 = vmatprep.subr.mxu0 0.0
  %672 = vmatpush1.msra.mxu0 0.0
  %673 = vmatprep.subr.mxu0 0.0
  %674 = vmatpush1.msra.mxu0 0.0
  %675 = vmatprep.subr.mxu0 0.0
  %676 = vmatpush1.msra.mxu0 0.0
  %677 = vmatprep.subr.mxu0 0.0
  %678 = vmatpush1.msra.mxu0 0.0
  %679 = vmatprep.subr.mxu0 0.0
  %680 = vmatpush1.msra.mxu0 0.0
  %681 = vmatprep.subr.mxu0 0.0
  %682 = vmatpush1.msra.mxu0 0.0
  %683 = vmatprep.mubr.f32.mxu0 0.0
  %684 = vmatmul.mubr.f32.gmra.mrb[0].mxu0 %v617
  %v685 = vpop.f32.mrb[0].mxu0
  %v686 = vadd.f32 0.0, %v685
  %v687 = vpop.f32.mrb[0].mxu0
  %v688 = vadd.f32 0.0, %v687
  %689 = vdwg.mxu0
  %v690 = vadd.f32 %v610, %v686
  %v691 = vadd.f32 %v612, %v688
  %v692 = vxor.u32 %v690, 2147483648
  %v693 = vmul.f32 %v692, 1.442695
  %v694 = vpow.pop %v693
  %v695 = vadd.f32 %v694, 1.0
  %v696 = vrcp.pop %v695
  %v697 = vmul.f32 1.0, %v696
  %v698 = vtanh.pop %v691
  %v699 = vxor.u32 %v691, 2147483648
  %v700 = vmul.f32 %v699, 1.442695
  %v701 = vpow.pop %v700
  %v702 = vadd.f32 %v701, 1.0
  %v703 = vrcp.pop %v702
  %v704 = vmul.f32 1.0, %v703
  %v705 = vmul.f32 %v697, %v535
  %v706 = vmul.f32 %v697, %v698
  %708 = vrot.lane.b32.xlu0 %v706, 64
  %v709 = vpop.permute.xlu0 %708
  %v711 = vadd.f32 %v705, %v709
  %v712 = vtanh.pop %v711
  %v713 = vmul.f32 %v704, %v712
  %s714 = scalar_lea.vmem %s0, 12
  %v715 = vld [vmem:[%s714] sm:$0xf]
  %v717 = vsel %vm167, %v715, 0
  %719 = vmatprep.subr.mxu0 %v174
  %720 = vmatpush1.msra.mxu0 %v172
  %721 = vmatprep.subr.mxu0 0.0
  %722 = vmatpush1.msra.mxu0 0.0
  %723 = vmatprep.subr.mxu0 0.0
  %724 = vmatpush1.msra.mxu0 0.0
  %725 = vmatprep.subr.mxu0 0.0
  %726 = vmatpush1.msra.mxu0 0.0
  %727 = vmatprep.subr.mxu0 0.0
  %728 = vmatpush1.msra.mxu0 0.0
  %729 = vmatprep.subr.mxu0 0.0
  %730 = vmatpush1.msra.mxu0 0.0
  %731 = vmatprep.subr.mxu0 0.0
  %732 = vmatpush1.msra.mxu0 0.0
  %733 = vmatprep.subr.mxu0 0.0
  %734 = vmatpush1.msra.mxu0 0.0
  %735 = vmatprep.subr.mxu0 0.0
  %736 = vmatpush1.msra.mxu0 0.0
  %737 = vmatprep.subr.mxu0 0.0
  %738 = vmatpush1.msra.mxu0 0.0
  %739 = vmatprep.subr.mxu0 0.0
  %740 = vmatpush1.msra.mxu0 0.0
  %741 = vmatprep.subr.mxu0 0.0
  %742 = vmatpush1.msra.mxu0 0.0
  %743 = vmatprep.subr.mxu0 0.0
  %744 = vmatpush1.msra.mxu0 0.0
  %745 = vmatprep.subr.mxu0 0.0
  %746 = vmatpush1.msra.mxu0 0.0
  %747 = vmatprep.subr.mxu0 0.0
  %748 = vmatpush1.msra.mxu0 0.0
  %749 = vmatprep.subr.mxu0 0.0
  %750 = vmatpush1.msra.mxu0 0.0
  %751 = vmatprep.subr.mxu0 0.0
  %752 = vmatpush1.msra.mxu0 0.0
  %753 = vmatprep.subr.mxu0 0.0
  %754 = vmatpush1.msra.mxu0 0.0
  %755 = vmatprep.subr.mxu0 0.0
  %756 = vmatpush1.msra.mxu0 0.0
  %757 = vmatprep.subr.mxu0 0.0
  %758 = vmatpush1.msra.mxu0 0.0
  %759 = vmatprep.subr.mxu0 0.0
  %760 = vmatpush1.msra.mxu0 0.0
  %761 = vmatprep.subr.mxu0 0.0
  %762 = vmatpush1.msra.mxu0 0.0
  %763 = vmatprep.subr.mxu0 0.0
  %764 = vmatpush1.msra.mxu0 0.0
  %765 = vmatprep.subr.mxu0 0.0
  %766 = vmatpush1.msra.mxu0 0.0
  %767 = vmatprep.subr.mxu0 0.0
  %768 = vmatpush1.msra.mxu0 0.0
  %769 = vmatprep.subr.mxu0 0.0
  %770 = vmatpush1.msra.mxu0 0.0
  %771 = vmatprep.subr.mxu0 0.0
  %772 = vmatpush1.msra.mxu0 0.0
  %773 = vmatprep.subr.mxu0 0.0
  %774 = vmatpush1.msra.mxu0 0.0
  %775 = vmatprep.subr.mxu0 0.0
  %776 = vmatpush1.msra.mxu0 0.0
  %777 = vmatprep.subr.mxu0 0.0
  %778 = vmatpush1.msra.mxu0 0.0
  %779 = vmatprep.subr.mxu0 0.0
  %780 = vmatpush1.msra.mxu0 0.0
  %781 = vmatprep.subr.mxu0 0.0
  %782 = vmatpush1.msra.mxu0 0.0
  %783 = vmatprep.mubr.f32.mxu0 0.0
  %784 = vmatmul.mubr.f32.gmra.mrb[0].mxu0 %v717
  %v785 = vpop.f32.mrb[0].mxu0
  %v786 = vadd.f32 %v149, %v785
  %v787 = vpop.f32.mrb[0].mxu0
  %v788 = vadd.f32 %v153, %v787
  %789 = vdwg.mxu0
  %791 = vrot.lane.b32.xlu0 %v713, 64
  %v792 = vpop.permute.xlu0 %791
  %v793 = vsel %vm263, %v792, 0
  %795 = vmatprep.subr.mxu0 %v248
  %796 = vmatpush1.msra.mxu0 %v247
  %797 = vmatprep.subr.mxu0 %v250
  %798 = vmatpush1.msra.mxu0 %v249
  %799 = vmatprep.subr.mxu0 %v252
  %800 = vmatpush1.msra.mxu0 %v251
  %801 = vmatprep.subr.mxu0 %v254
  %802 = vmatpush1.msra.mxu0 %v253
  %803 = vmatprep.subr.mxu0 %v256
  %804 = vmatpush1.msra.mxu0 %v255
  %805 = vmatprep.subr.mxu0 %v258
  %806 = vmatpush1.msra.mxu0 %v257
  %807 = vmatprep.subr.mxu0 %v260
  %808 = vmatpush1.msra.mxu0 %v259
  %809 = vmatprep.subr.mxu0 %v262
  %810 = vmatpush1.msra.mxu0 %v261
  %811 = vmatprep.subr.mxu0 0.0
  %812 = vmatpush1.msra.mxu0 0.0
  %813 = vmatprep.subr.mxu0 0.0
  %814 = vmatpush1.msra.mxu0 0.0
  %815 = vmatprep.subr.mxu0 0.0
  %816 = vmatpush1.msra.mxu0 0.0
  %817 = vmatprep.subr.mxu0 0.0
  %818 = vmatpush1.msra.mxu0 0.0
  %819 = vmatprep.subr.mxu0 0.0
  %820 = vmatpush1.msra.mxu0 0.0
  %821 = vmatprep.subr.mxu0 0.0
  %822 = vmatpush1.msra.mxu0 0.0
  %823 = vmatprep.subr.mxu0 0.0
  %824 = vmatpush1.msra.mxu0 0.0
  %825 = vmatprep.subr.mxu0 0.0
  %826 = vmatpush1.msra.mxu0 0.0
  %827 = vmatprep.subr.mxu0 0.0
  %828 = vmatpush1.msra.mxu0 0.0
  %829 = vmatprep.subr.mxu0 0.0
  %830 = vmatpush1.msra.mxu0 0.0
  %831 = vmatprep.subr.mxu0 0.0
  %832 = vmatpush1.msra.mxu0 0.0
  %833 = vmatprep.subr.mxu0 0.0
  %834 = vmatpush1.msra.mxu0 0.0
  %835 = vmatprep.subr.mxu0 0.0
  %836 = vmatpush1.msra.mxu0 0.0
  %837 = vmatprep.subr.mxu0 0.0
  %838 = vmatpush1.msra.mxu0 0.0
  %839 = vmatprep.subr.mxu0 0.0
  %840 = vmatpush1.msra.mxu0 0.0
  %841 = vmatprep.subr.mxu0 0.0
  %842 = vmatpush1.msra.mxu0 0.0
  %843 = vmatprep.subr.mxu0 0.0
  %844 = vmatpush1.msra.mxu0 0.0
  %845 = vmatprep.subr.mxu0 0.0
  %846 = vmatpush1.msra.mxu0 0.0
  %847 = vmatprep.subr.mxu0 0.0
  %848 = vmatpush1.msra.mxu0 0.0
  %849 = vmatprep.subr.mxu0 0.0
  %850 = vmatpush1.msra.mxu0 0.0
  %851 = vmatprep.subr.mxu0 0.0
  %852 = vmatpush1.msra.mxu0 0.0
  %853 = vmatprep.subr.mxu0 0.0
  %854 = vmatpush1.msra.mxu0 0.0
  %855 = vmatprep.subr.mxu0 0.0
  %856 = vmatpush1.msra.mxu0 0.0
  %857 = vmatprep.subr.mxu0 0.0
  %858 = vmatpush1.msra.mxu0 0.0
  %859 = vmatprep.mubr.f32.mxu0 0.0
  %860 = vmatmul.mubr.f32.gmra.mrb[0].mxu0 %v793
  %v861 = vpop.f32.mrb[0].mxu0
  %v862 = vadd.f32 0.0, %v861
  %v863 = vpop.f32.mrb[0].mxu0
  %v864 = vadd.f32 0.0, %v863
  %865 = vdwg.mxu0
  %v866 = vadd.f32 %v786, %v862
  %v867 = vadd.f32 %v788, %v864
  %v868 = vxor.u32 %v866, 2147483648
  %v869 = vmul.f32 %v868, 1.442695
  %v870 = vpow.pop %v869
  %v871 = vadd.f32 %v870, 1.0
  %v872 = vrcp.pop %v871
  %v873 = vmul.f32 1.0, %v872
  %v874 = vtanh.pop %v867
  %v875 = vxor.u32 %v867, 2147483648
  %v876 = vmul.f32 %v875, 1.442695
  %v877 = vpow.pop %v876
  %v878 = vadd.f32 %v877, 1.0
  %v879 = vrcp.pop %v878
  %v880 = vmul.f32 1.0, %v879
  %v881 = vmul.f32 %v873, %v711
  %v882 = vmul.f32 %v873, %v874
  %884 = vrot.lane.b32.xlu0 %v882, 64
  %v885 = vpop.permute.xlu0 %884
  %v887 = vadd.f32 %v881, %v885
  %v888 = vtanh.pop %v887
  %v889 = vmul.f32 %v880, %v888
  %s890 = scalar_lea.vmem %s0, 16
  %v891 = vld [vmem:[%s890] sm:$0xf]
  %v893 = vsel %vm167, %v891, 0
  %895 = vmatprep.subr.mxu0 %v174
  %896 = vmatpush1.msra.mxu0 %v172
  %897 = vmatprep.subr.mxu0 0.0
  %898 = vmatpush1.msra.mxu0 0.0
  %899 = vmatprep.subr.mxu0 0.0
  %900 = vmatpush1.msra.mxu0 0.0
  %901 = vmatprep.subr.mxu0 0.0
  %902 = vmatpush1.msra.mxu0 0.0
  %903 = vmatprep.subr.mxu0 0.0
  %904 = vmatpush1.msra.mxu0 0.0
  %905 = vmatprep.subr.mxu0 0.0
  %906 = vmatpush1.msra.mxu0 0.0
  %907 = vmatprep.subr.mxu0 0.0
  %908 = vmatpush1.msra.mxu0 0.0
  %909 = vmatprep.subr.mxu0 0.0
  %910 = vmatpush1.msra.mxu0 0.0
  %911 = vmatprep.subr.mxu0 0.0
  %912 = vmatpush1.msra.mxu0 0.0
  %913 = vmatprep.subr.mxu0 0.0
  %914 = vmatpush1.msra.mxu0 0.0
  %915 = vmatprep.subr.mxu0 0.0
  %916 = vmatpush1.msra.mxu0 0.0
  %917 = vmatprep.subr.mxu0 0.0
  %918 = vmatpush1.msra.mxu0 0.0
  %919 = vmatprep.subr.mxu0 0.0
  %920 = vmatpush1.msra.mxu0 0.0
  %921 = vmatprep.subr.mxu0 0.0
  %922 = vmatpush1.msra.mxu0 0.0
  %923 = vmatprep.subr.mxu0 0.0
  %924 = vmatpush1.msra.mxu0 0.0
  %925 = vmatprep.subr.mxu0 0.0
  %926 = vmatpush1.msra.mxu0 0.0
  %927 = vmatprep.subr.mxu0 0.0
  %928 = vmatpush1.msra.mxu0 0.0
  %929 = vmatprep.subr.mxu0 0.0
  %930 = vmatpush1.msra.mxu0 0.0
  %931 = vmatprep.subr.mxu0 0.0
  %932 = vmatpush1.msra.mxu0 0.0
  %933 = vmatprep.subr.mxu0 0.0
  %934 = vmatpush1.msra.mxu0 0.0
  %935 = vmatprep.subr.mxu0 0.0
  %936 = vmatpush1.msra.mxu0 0.0
  %937 = vmatprep.subr.mxu0 0.0
  %938 = vmatpush1.msra.mxu0 0.0
  %939 = vmatprep.subr.mxu0 0.0
  %940 = vmatpush1.msra.mxu0 0.0
  %941 = vmatprep.subr.mxu0 0.0
  %942 = vmatpush1.msra.mxu0 0.0
  %943 = vmatprep.subr.mxu0 0.0
  %944 = vmatpush1.msra.mxu0 0.0
  %945 = vmatprep.subr.mxu0 0.0
  %946 = vmatpush1.msra.mxu0 0.0
  %947 = vmatprep.subr.mxu0 0.0
  %948 = vmatpush1.msra.mxu0 0.0
  %949 = vmatprep.subr.mxu0 0.0
  %950 = vmatpush1.msra.mxu0 0.0
  %951 = vmatprep.subr.mxu0 0.0
  %952 = vmatpush1.msra.mxu0 0.0
  %953 = vmatprep.subr.mxu0 0.0
  %954 = vmatpush1.msra.mxu0 0.0
  %955 = vmatprep.subr.mxu0 0.0
  %956 = vmatpush1.msra.mxu0 0.0
  %957 = vmatprep.subr.mxu0 0.0
  %958 = vmatpush1.msra.mxu0 0.0
  %959 = vmatprep.mubr.f32.mxu0 0.0
  %960 = vmatmul.mubr.f32.gmra.mrb[0].mxu0 %v893
  %v961 = vpop.f32.mrb[0].mxu0
  %v962 = vadd.f32 %v149, %v961
  %v963 = vpop.f32.mrb[0].mxu0
  %v964 = vadd.f32 %v153, %v963
  %965 = vdwg.mxu0
  %967 = vrot.lane.b32.xlu0 %v889, 64
  %v968 = vpop.permute.xlu0 %967
  %v969 = vsel %vm263, %v968, 0
  %971 = vmatprep.subr.mxu0 %v248
  %972 = vmatpush1.msra.mxu0 %v247
  %973 = vmatprep.subr.mxu0 %v250
  %974 = vmatpush1.msra.mxu0 %v249
  %975 = vmatprep.subr.mxu0 %v252
  %976 = vmatpush1.msra.mxu0 %v251
  %977 = vmatprep.subr.mxu0 %v254
  %978 = vmatpush1.msra.mxu0 %v253
  %979 = vmatprep.subr.mxu0 %v256
  %980 = vmatpush1.msra.mxu0 %v255
  %981 = vmatprep.subr.mxu0 %v258
  %982 = vmatpush1.msra.mxu0 %v257
  %983 = vmatprep.subr.mxu0 %v260
  %984 = vmatpush1.msra.mxu0 %v259
  %985 = vmatprep.subr.mxu0 %v262
  %986 = vmatpush1.msra.mxu0 %v261
  %987 = vmatprep.subr.mxu0 0.0
  %988 = vmatpush1.msra.mxu0 0.0
  %989 = vmatprep.subr.mxu0 0.0
  %990 = vmatpush1.msra.mxu0 0.0
  %991 = vmatprep.subr.mxu0 0.0
  %992 = vmatpush1.msra.mxu0 0.0
  %993 = vmatprep.subr.mxu0 0.0
  %994 = vmatpush1.msra.mxu0 0.0
  %995 = vmatprep.subr.mxu0 0.0
  %996 = vmatpush1.msra.mxu0 0.0
  %997 = vmatprep.subr.mxu0 0.0
  %998 = vmatpush1.msra.mxu0 0.0
  %999 = vmatprep.subr.mxu0 0.0
  %1000 = vmatpush1.msra.mxu0 0.0
  %1001 = vmatprep.subr.mxu0 0.0
  %1002 = vmatpush1.msra.mxu0 0.0
  %1003 = vmatprep.subr.mxu0 0.0
  %1004 = vmatpush1.msra.mxu0 0.0
  %1005 = vmatprep.subr.mxu0 0.0
  %1006 = vmatpush1.msra.mxu0 0.0
  %1007 = vmatprep.subr.mxu0 0.0
  %1008 = vmatpush1.msra.mxu0 0.0
  %1009 = vmatprep.subr.mxu0 0.0
  %1010 = vmatpush1.msra.mxu0 0.0
  %1011 = vmatprep.subr.mxu0 0.0
  %1012 = vmatpush1.msra.mxu0 0.0
  %1013 = vmatprep.subr.mxu0 0.0
  %1014 = vmatpush1.msra.mxu0 0.0
  %1015 = vmatprep.subr.mxu0 0.0
  %1016 = vmatpush1.msra.mxu0 0.0
  %1017 = vmatprep.subr.mxu0 0.0
  %1018 = vmatpush1.msra.mxu0 0.0
  %1019 = vmatprep.subr.mxu0 0.0
  %1020 = vmatpush1.msra.mxu0 0.0
  %1021 = vmatprep.subr.mxu0 0.0
  %1022 = vmatpush1.msra.mxu0 0.0
  %1023 = vmatprep.subr.mxu0 0.0
  %1024 = vmatpush1.msra.mxu0 0.0
  %1025 = vmatprep.subr.mxu0 0.0
  %1026 = vmatpush1.msra.mxu0 0.0
  %1027 = vmatprep.subr.mxu0 0.0
  %1028 = vmatpush1.msra.mxu0 0.0
  %1029 = vmatprep.subr.mxu0 0.0
  %1030 = vmatpush1.msra.mxu0 0.0
  %1031 = vmatprep.subr.mxu0 0.0
  %1032 = vmatpush1.msra.mxu0 0.0
  %1033 = vmatprep.subr.mxu0 0.0
  %1034 = vmatpush1.msra.mxu0 0.0
  %1035 = vmatprep.mubr.f32.mxu0 0.0
  %1036 = vmatmul.mubr.f32.gmra.mrb[0].mxu0 %v969
  %v1037 = vpop.f32.mrb[0].mxu0
  %v1038 = vadd.f32 0.0, %v1037
  %v1039 = vpop.f32.mrb[0].mxu0
  %v1040 = vadd.f32 0.0, %v1039
  %1041 = vdwg.mxu0
  %v1042 = vadd.f32 %v962, %v1038
  %v1043 = vadd.f32 %v964, %v1040
  %v1044 = vxor.u32 %v1042, 2147483648
  %v1045 = vmul.f32 %v1044, 1.442695
  %v1046 = vpow.pop %v1045
  %v1047 = vadd.f32 %v1046, 1.0
  %v1048 = vrcp.pop %v1047
  %v1049 = vmul.f32 1.0, %v1048
  %v1050 = vtanh.pop %v1043
  %v1051 = vxor.u32 %v1043, 2147483648
  %v1052 = vmul.f32 %v1051, 1.442695
  %v1053 = vpow.pop %v1052
  %v1054 = vadd.f32 %v1053, 1.0
  %v1055 = vrcp.pop %v1054
  %v1056 = vmul.f32 1.0, %v1055
  %v1057 = vmul.f32 %v1049, %v887
  %v1058 = vmul.f32 %v1049, %v1050
  %1060 = vrot.lane.b32.xlu0 %v1058, 64
  %v1061 = vpop.permute.xlu0 %1060
  %v1063 = vadd.f32 %v1057, %v1061
  %v1064 = vtanh.pop %v1063
  %v1065 = vmul.f32 %v1056, %v1064
  %s1066 = scalar_lea.vmem %s0, 20
  %v1067 = vld [vmem:[%s1066] sm:$0xf]
  %v1069 = vsel %vm167, %v1067, 0
  %1071 = vmatprep.subr.mxu0 %v174
  %1072 = vmatpush1.msra.mxu0 %v172
  %1073 = vmatprep.subr.mxu0 0.0
  %1074 = vmatpush1.msra.mxu0 0.0
  %1075 = vmatprep.subr.mxu0 0.0
  %1076 = vmatpush1.msra.mxu0 0.0
  %1077 = vmatprep.subr.mxu0 0.0
  %1078 = vmatpush1.msra.mxu0 0.0
  %1079 = vmatprep.subr.mxu0 0.0
  %1080 = vmatpush1.msra.mxu0 0.0
  %1081 = vmatprep.subr.mxu0 0.0
  %1082 = vmatpush1.msra.mxu0 0.0
  %1083 = vmatprep.subr.mxu0 0.0
  %1084 = vmatpush1.msra.mxu0 0.0
  %1085 = vmatprep.subr.mxu0 0.0
  %1086 = vmatpush1.msra.mxu0 0.0
  %1087 = vmatprep.subr.mxu0 0.0
  %1088 = vmatpush1.msra.mxu0 0.0
  %1089 = vmatprep.subr.mxu0 0.0
  %1090 = vmatpush1.msra.mxu0 0.0
  %1091 = vmatprep.subr.mxu0 0.0
  %1092 = vmatpush1.msra.mxu0 0.0
  %1093 = vmatprep.subr.mxu0 0.0
  %1094 = vmatpush1.msra.mxu0 0.0
  %1095 = vmatprep.subr.mxu0 0.0
  %1096 = vmatpush1.msra.mxu0 0.0
  %1097 = vmatprep.subr.mxu0 0.0
  %1098 = vmatpush1.msra.mxu0 0.0
  %1099 = vmatprep.subr.mxu0 0.0
  %1100 = vmatpush1.msra.mxu0 0.0
  %1101 = vmatprep.subr.mxu0 0.0
  %1102 = vmatpush1.msra.mxu0 0.0
  %1103 = vmatprep.subr.mxu0 0.0
  %1104 = vmatpush1.msra.mxu0 0.0
  %1105 = vmatprep.subr.mxu0 0.0
  %1106 = vmatpush1.msra.mxu0 0.0
  %1107 = vmatprep.subr.mxu0 0.0
  %1108 = vmatpush1.msra.mxu0 0.0
  %1109 = vmatprep.subr.mxu0 0.0
  %1110 = vmatpush1.msra.mxu0 0.0
  %1111 = vmatprep.subr.mxu0 0.0
  %1112 = vmatpush1.msra.mxu0 0.0
  %1113 = vmatprep.subr.mxu0 0.0
  %1114 = vmatpush1.msra.mxu0 0.0
  %1115 = vmatprep.subr.mxu0 0.0
  %1116 = vmatpush1.msra.mxu0 0.0
  %1117 = vmatprep.subr.mxu0 0.0
  %1118 = vmatpush1.msra.mxu0 0.0
  %1119 = vmatprep.subr.mxu0 0.0
  %1120 = vmatpush1.msra.mxu0 0.0
  %1121 = vmatprep.subr.mxu0 0.0
  %1122 = vmatpush1.msra.mxu0 0.0
  %1123 = vmatprep.subr.mxu0 0.0
  %1124 = vmatpush1.msra.mxu0 0.0
  %1125 = vmatprep.subr.mxu0 0.0
  %1126 = vmatpush1.msra.mxu0 0.0
  %1127 = vmatprep.subr.mxu0 0.0
  %1128 = vmatpush1.msra.mxu0 0.0
  %1129 = vmatprep.subr.mxu0 0.0
  %1130 = vmatpush1.msra.mxu0 0.0
  %1131 = vmatprep.subr.mxu0 0.0
  %1132 = vmatpush1.msra.mxu0 0.0
  %1133 = vmatprep.subr.mxu0 0.0
  %1134 = vmatpush1.msra.mxu0 0.0
  %1135 = vmatprep.mubr.f32.mxu0 0.0
  %1136 = vmatmul.mubr.f32.gmra.mrb[0].mxu0 %v1069
  %v1137 = vpop.f32.mrb[0].mxu0
  %v1138 = vadd.f32 %v149, %v1137
  %v1139 = vpop.f32.mrb[0].mxu0
  %v1140 = vadd.f32 %v153, %v1139
  %1141 = vdwg.mxu0
  %1143 = vrot.lane.b32.xlu0 %v1065, 64
  %v1144 = vpop.permute.xlu0 %1143
  %v1145 = vsel %vm263, %v1144, 0
  %1147 = vmatprep.subr.mxu0 %v248
  %1148 = vmatpush1.msra.mxu0 %v247
  %1149 = vmatprep.subr.mxu0 %v250
  %1150 = vmatpush1.msra.mxu0 %v249
  %1151 = vmatprep.subr.mxu0 %v252
  %1152 = vmatpush1.msra.mxu0 %v251
  %1153 = vmatprep.subr.mxu0 %v254
  %1154 = vmatpush1.msra.mxu0 %v253
  %1155 = vmatprep.subr.mxu0 %v256
  %1156 = vmatpush1.msra.mxu0 %v255
  %1157 = vmatprep.subr.mxu0 %v258
  %1158 = vmatpush1.msra.mxu0 %v257
  %1159 = vmatprep.subr.mxu0 %v260
  %1160 = vmatpush1.msra.mxu0 %v259
  %1161 = vmatprep.subr.mxu0 %v262
  %1162 = vmatpush1.msra.mxu0 %v261
  %1163 = vmatprep.subr.mxu0 0.0
  %1164 = vmatpush1.msra.mxu0 0.0
  %1165 = vmatprep.subr.mxu0 0.0
  %1166 = vmatpush1.msra.mxu0 0.0
  %1167 = vmatprep.subr.mxu0 0.0
  %1168 = vmatpush1.msra.mxu0 0.0
  %1169 = vmatprep.subr.mxu0 0.0
  %1170 = vmatpush1.msra.mxu0 0.0
  %1171 = vmatprep.subr.mxu0 0.0
  %1172 = vmatpush1.msra.mxu0 0.0
  %1173 = vmatprep.subr.mxu0 0.0
  %1174 = vmatpush1.msra.mxu0 0.0
  %1175 = vmatprep.subr.mxu0 0.0
  %1176 = vmatpush1.msra.mxu0 0.0
  %1177 = vmatprep.subr.mxu0 0.0
  %1178 = vmatpush1.msra.mxu0 0.0
  %1179 = vmatprep.subr.mxu0 0.0
  %1180 = vmatpush1.msra.mxu0 0.0
  %1181 = vmatprep.subr.mxu0 0.0
  %1182 = vmatpush1.msra.mxu0 0.0
  %1183 = vmatprep.subr.mxu0 0.0
  %1184 = vmatpush1.msra.mxu0 0.0
  %1185 = vmatprep.subr.mxu0 0.0
  %1186 = vmatpush1.msra.mxu0 0.0
  %1187 = vmatprep.subr.mxu0 0.0
  %1188 = vmatpush1.msra.mxu0 0.0
  %1189 = vmatprep.subr.mxu0 0.0
  %1190 = vmatpush1.msra.mxu0 0.0
  %1191 = vmatprep.subr.mxu0 0.0
  %1192 = vmatpush1.msra.mxu0 0.0
  %1193 = vmatprep.subr.mxu0 0.0
  %1194 = vmatpush1.msra.mxu0 0.0
  %1195 = vmatprep.subr.mxu0 0.0
  %1196 = vmatpush1.msra.mxu0 0.0
  %1197 = vmatprep.subr.mxu0 0.0
  %1198 = vmatpush1.msra.mxu0 0.0
  %1199 = vmatprep.subr.mxu0 0.0
  %1200 = vmatpush1.msra.mxu0 0.0
  %1201 = vmatprep.subr.mxu0 0.0
  %1202 = vmatpush1.msra.mxu0 0.0
  %1203 = vmatprep.subr.mxu0 0.0
  %1204 = vmatpush1.msra.mxu0 0.0
  %1205 = vmatprep.subr.mxu0 0.0
  %1206 = vmatpush1.msra.mxu0 0.0
  %1207 = vmatprep.subr.mxu0 0.0
  %1208 = vmatpush1.msra.mxu0 0.0
  %1209 = vmatprep.subr.mxu0 0.0
  %1210 = vmatpush1.msra.mxu0 0.0
  %1211 = vmatprep.mubr.f32.mxu0 0.0
  %1212 = vmatmul.mubr.f32.gmra.mrb[0].mxu0 %v1145
  %v1213 = vpop.f32.mrb[0].mxu0
  %v1214 = vadd.f32 0.0, %v1213
  %v1215 = vpop.f32.mrb[0].mxu0
  %v1216 = vadd.f32 0.0, %v1215
  %1217 = vdwg.mxu0
  %v1218 = vadd.f32 %v1138, %v1214
  %v1219 = vadd.f32 %v1140, %v1216
  %v1220 = vxor.u32 %v1218, 2147483648
  %v1221 = vmul.f32 %v1220, 1.442695
  %v1222 = vpow.pop %v1221
  %v1223 = vadd.f32 %v1222, 1.0
  %v1224 = vrcp.pop %v1223
  %v1225 = vmul.f32 1.0, %v1224
  %v1226 = vtanh.pop %v1219
  %v1227 = vxor.u32 %v1219, 2147483648
  %v1228 = vmul.f32 %v1227, 1.442695
  %v1229 = vpow.pop %v1228
  %v1230 = vadd.f32 %v1229, 1.0
  %v1231 = vrcp.pop %v1230
  %v1232 = vmul.f32 1.0, %v1231
  %v1233 = vmul.f32 %v1225, %v1063
  %v1234 = vmul.f32 %v1225, %v1226
  %1236 = vrot.lane.b32.xlu0 %v1234, 64
  %v1237 = vpop.permute.xlu0 %1236
  %v1239 = vadd.f32 %v1233, %v1237
  %v1240 = vtanh.pop %v1239
  %v1241 = vmul.f32 %v1232, %v1240
  %s1242 = scalar_lea.vmem %s0, 24
  %v1243 = vld [vmem:[%s1242] sm:$0xf]
  %v1245 = vsel %vm167, %v1243, 0
  %1247 = vmatprep.subr.mxu0 %v174
  %1248 = vmatpush1.msra.mxu0 %v172
  %1249 = vmatprep.subr.mxu0 0.0
  %1250 = vmatpush1.msra.mxu0 0.0
  %1251 = vmatprep.subr.mxu0 0.0
  %1252 = vmatpush1.msra.mxu0 0.0
  %1253 = vmatprep.subr.mxu0 0.0
  %1254 = vmatpush1.msra.mxu0 0.0
  %1255 = vmatprep.subr.mxu0 0.0
  %1256 = vmatpush1.msra.mxu0 0.0
  %1257 = vmatprep.subr.mxu0 0.0
  %1258 = vmatpush1.msra.mxu0 0.0
  %1259 = vmatprep.subr.mxu0 0.0
  %1260 = vmatpush1.msra.mxu0 0.0
  %1261 = vmatprep.subr.mxu0 0.0
  %1262 = vmatpush1.msra.mxu0 0.0
  %1263 = vmatprep.subr.mxu0 0.0
  %1264 = vmatpush1.msra.mxu0 0.0
  %1265 = vmatprep.subr.mxu0 0.0
  %1266 = vmatpush1.msra.mxu0 0.0
  %1267 = vmatprep.subr.mxu0 0.0
  %1268 = vmatpush1.msra.mxu0 0.0
  %1269 = vmatprep.subr.mxu0 0.0
  %1270 = vmatpush1.msra.mxu0 0.0
  %1271 = vmatprep.subr.mxu0 0.0
  %1272 = vmatpush1.msra.mxu0 0.0
  %1273 = vmatprep.subr.mxu0 0.0
  %1274 = vmatpush1.msra.mxu0 0.0
  %1275 = vmatprep.subr.mxu0 0.0
  %1276 = vmatpush1.msra.mxu0 0.0
  %1277 = vmatprep.subr.mxu0 0.0
  %1278 = vmatpush1.msra.mxu0 0.0
  %1279 = vmatprep.subr.mxu0 0.0
  %1280 = vmatpush1.msra.mxu0 0.0
  %1281 = vmatprep.subr.mxu0 0.0
  %1282 = vmatpush1.msra.mxu0 0.0
  %1283 = vmatprep.subr.mxu0 0.0
  %1284 = vmatpush1.msra.mxu0 0.0
  %1285 = vmatprep.subr.mxu0 0.0
  %1286 = vmatpush1.msra.mxu0 0.0
  %1287 = vmatprep.subr.mxu0 0.0
  %1288 = vmatpush1.msra.mxu0 0.0
  %1289 = vmatprep.subr.mxu0 0.0
  %1290 = vmatpush1.msra.mxu0 0.0
  %1291 = vmatprep.subr.mxu0 0.0
  %1292 = vmatpush1.msra.mxu0 0.0
  %1293 = vmatprep.subr.mxu0 0.0
  %1294 = vmatpush1.msra.mxu0 0.0
  %1295 = vmatprep.subr.mxu0 0.0
  %1296 = vmatpush1.msra.mxu0 0.0
  %1297 = vmatprep.subr.mxu0 0.0
  %1298 = vmatpush1.msra.mxu0 0.0
  %1299 = vmatprep.subr.mxu0 0.0
  %1300 = vmatpush1.msra.mxu0 0.0
  %1301 = vmatprep.subr.mxu0 0.0
  %1302 = vmatpush1.msra.mxu0 0.0
  %1303 = vmatprep.subr.mxu0 0.0
  %1304 = vmatpush1.msra.mxu0 0.0
  %1305 = vmatprep.subr.mxu0 0.0
  %1306 = vmatpush1.msra.mxu0 0.0
  %1307 = vmatprep.subr.mxu0 0.0
  %1308 = vmatpush1.msra.mxu0 0.0
  %1309 = vmatprep.subr.mxu0 0.0
  %1310 = vmatpush1.msra.mxu0 0.0
  %1311 = vmatprep.mubr.f32.mxu0 0.0
  %1312 = vmatmul.mubr.f32.gmra.mrb[0].mxu0 %v1245
  %v1313 = vpop.f32.mrb[0].mxu0
  %v1314 = vadd.f32 %v149, %v1313
  %v1315 = vpop.f32.mrb[0].mxu0
  %v1316 = vadd.f32 %v153, %v1315
  %1317 = vdwg.mxu0
  %1319 = vrot.lane.b32.xlu0 %v1241, 64
  %v1320 = vpop.permute.xlu0 %1319
  %v1321 = vsel %vm263, %v1320, 0
  %1323 = vmatprep.subr.mxu0 %v248
  %1324 = vmatpush1.msra.mxu0 %v247
  %1325 = vmatprep.subr.mxu0 %v250
  %1326 = vmatpush1.msra.mxu0 %v249
  %1327 = vmatprep.subr.mxu0 %v252
  %1328 = vmatpush1.msra.mxu0 %v251
  %1329 = vmatprep.subr.mxu0 %v254
  %1330 = vmatpush1.msra.mxu0 %v253
  %1331 = vmatprep.subr.mxu0 %v256
  %1332 = vmatpush1.msra.mxu0 %v255
  %1333 = vmatprep.subr.mxu0 %v258
  %1334 = vmatpush1.msra.mxu0 %v257
  %1335 = vmatprep.subr.mxu0 %v260
  %1336 = vmatpush1.msra.mxu0 %v259
  %1337 = vmatprep.subr.mxu0 %v262
  %1338 = vmatpush1.msra.mxu0 %v261
  %1339 = vmatprep.subr.mxu0 0.0
  %1340 = vmatpush1.msra.mxu0 0.0
  %1341 = vmatprep.subr.mxu0 0.0
  %1342 = vmatpush1.msra.mxu0 0.0
  %1343 = vmatprep.subr.mxu0 0.0
  %1344 = vmatpush1.msra.mxu0 0.0
  %1345 = vmatprep.subr.mxu0 0.0
  %1346 = vmatpush1.msra.mxu0 0.0
  %1347 = vmatprep.subr.mxu0 0.0
  %1348 = vmatpush1.msra.mxu0 0.0
  %1349 = vmatprep.subr.mxu0 0.0
  %1350 = vmatpush1.msra.mxu0 0.0
  %1351 = vmatprep.subr.mxu0 0.0
  %1352 = vmatpush1.msra.mxu0 0.0
  %1353 = vmatprep.subr.mxu0 0.0
  %1354 = vmatpush1.msra.mxu0 0.0
  %1355 = vmatprep.subr.mxu0 0.0
  %1356 = vmatpush1.msra.mxu0 0.0
  %1357 = vmatprep.subr.mxu0 0.0
  %1358 = vmatpush1.msra.mxu0 0.0
  %1359 = vmatprep.subr.mxu0 0.0
  %1360 = vmatpush1.msra.mxu0 0.0
  %1361 = vmatprep.subr.mxu0 0.0
  %1362 = vmatpush1.msra.mxu0 0.0
  %1363 = vmatprep.subr.mxu0 0.0
  %1364 = vmatpush1.msra.mxu0 0.0
  %1365 = vmatprep.subr.mxu0 0.0
  %1366 = vmatpush1.msra.mxu0 0.0
  %1367 = vmatprep.subr.mxu0 0.0
  %1368 = vmatpush1.msra.mxu0 0.0
  %1369 = vmatprep.subr.mxu0 0.0
  %1370 = vmatpush1.msra.mxu0 0.0
  %1371 = vmatprep.subr.mxu0 0.0
  %1372 = vmatpush1.msra.mxu0 0.0
  %1373 = vmatprep.subr.mxu0 0.0
  %1374 = vmatpush1.msra.mxu0 0.0
  %1375 = vmatprep.subr.mxu0 0.0
  %1376 = vmatpush1.msra.mxu0 0.0
  %1377 = vmatprep.subr.mxu0 0.0
  %1378 = vmatpush1.msra.mxu0 0.0
  %1379 = vmatprep.subr.mxu0 0.0
  %1380 = vmatpush1.msra.mxu0 0.0
  %1381 = vmatprep.subr.mxu0 0.0
  %1382 = vmatpush1.msra.mxu0 0.0
  %1383 = vmatprep.subr.mxu0 0.0
  %1384 = vmatpush1.msra.mxu0 0.0
  %1385 = vmatprep.subr.mxu0 0.0
  %1386 = vmatpush1.msra.mxu0 0.0
  %1387 = vmatprep.mubr.f32.mxu0 0.0
  %1388 = vmatmul.mubr.f32.gmra.mrb[0].mxu0 %v1321
  %v1389 = vpop.f32.mrb[0].mxu0
  %v1390 = vadd.f32 0.0, %v1389
  %v1391 = vpop.f32.mrb[0].mxu0
  %v1392 = vadd.f32 0.0, %v1391
  %1393 = vdwg.mxu0
  %v1394 = vadd.f32 %v1314, %v1390
  %v1395 = vadd.f32 %v1316, %v1392
  %v1396 = vxor.u32 %v1394, 2147483648
  %v1397 = vmul.f32 %v1396, 1.442695
  %v1398 = vpow.pop %v1397
  %v1399 = vadd.f32 %v1398, 1.0
  %v1400 = vrcp.pop %v1399
  %v1401 = vmul.f32 1.0, %v1400
  %v1402 = vtanh.pop %v1395
  %v1403 = vxor.u32 %v1395, 2147483648
  %v1404 = vmul.f32 %v1403, 1.442695
  %v1405 = vpow.pop %v1404
  %v1406 = vadd.f32 %v1405, 1.0
  %v1407 = vrcp.pop %v1406
  %v1408 = vmul.f32 1.0, %v1407
  %v1409 = vmul.f32 %v1401, %v1239
  %v1410 = vmul.f32 %v1401, %v1402
  %1412 = vrot.lane.b32.xlu0 %v1410, 64
  %v1413 = vpop.permute.xlu0 %1412
  %v1415 = vadd.f32 %v1409, %v1413
  %v1416 = vtanh.pop %v1415
  %v1417 = vmul.f32 %v1408, %v1416
  %s1418 = scalar_lea.vmem %s0, 28
  %v1419 = vld [vmem:[%s1418] sm:$0xf]
  %v1421 = vsel %vm167, %v1419, 0
  %1423 = vmatprep.subr.mxu0 %v174
  %1424 = vmatpush1.msra.mxu0 %v172
  %1425 = vmatprep.subr.mxu0 0.0
  %1426 = vmatpush1.msra.mxu0 0.0
  %1427 = vmatprep.subr.mxu0 0.0
  %1428 = vmatpush1.msra.mxu0 0.0
  %1429 = vmatprep.subr.mxu0 0.0
  %1430 = vmatpush1.msra.mxu0 0.0
  %1431 = vmatprep.subr.mxu0 0.0
  %1432 = vmatpush1.msra.mxu0 0.0
  %1433 = vmatprep.subr.mxu0 0.0
  %1434 = vmatpush1.msra.mxu0 0.0
  %1435 = vmatprep.subr.mxu0 0.0
  %1436 = vmatpush1.msra.mxu0 0.0
  %1437 = vmatprep.subr.mxu0 0.0
  %1438 = vmatpush1.msra.mxu0 0.0
  %1439 = vmatprep.subr.mxu0 0.0
  %1440 = vmatpush1.msra.mxu0 0.0
  %1441 = vmatprep.subr.mxu0 0.0
  %1442 = vmatpush1.msra.mxu0 0.0
  %1443 = vmatprep.subr.mxu0 0.0
  %1444 = vmatpush1.msra.mxu0 0.0
  %1445 = vmatprep.subr.mxu0 0.0
  %1446 = vmatpush1.msra.mxu0 0.0
  %1447 = vmatprep.subr.mxu0 0.0
  %1448 = vmatpush1.msra.mxu0 0.0
  %1449 = vmatprep.subr.mxu0 0.0
  %1450 = vmatpush1.msra.mxu0 0.0
  %1451 = vmatprep.subr.mxu0 0.0
  %1452 = vmatpush1.msra.mxu0 0.0
  %1453 = vmatprep.subr.mxu0 0.0
  %1454 = vmatpush1.msra.mxu0 0.0
  %1455 = vmatprep.subr.mxu0 0.0
  %1456 = vmatpush1.msra.mxu0 0.0
  %1457 = vmatprep.subr.mxu0 0.0
  %1458 = vmatpush1.msra.mxu0 0.0
  %1459 = vmatprep.subr.mxu0 0.0
  %1460 = vmatpush1.msra.mxu0 0.0
  %1461 = vmatprep.subr.mxu0 0.0
  %1462 = vmatpush1.msra.mxu0 0.0
  %1463 = vmatprep.subr.mxu0 0.0
  %1464 = vmatpush1.msra.mxu0 0.0
  %1465 = vmatprep.subr.mxu0 0.0
  %1466 = vmatpush1.msra.mxu0 0.0
  %1467 = vmatprep.subr.mxu0 0.0
  %1468 = vmatpush1.msra.mxu0 0.0
  %1469 = vmatprep.subr.mxu0 0.0
  %1470 = vmatpush1.msra.mxu0 0.0
  %1471 = vmatprep.subr.mxu0 0.0
  %1472 = vmatpush1.msra.mxu0 0.0
  %1473 = vmatprep.subr.mxu0 0.0
  %1474 = vmatpush1.msra.mxu0 0.0
  %1475 = vmatprep.subr.mxu0 0.0
  %1476 = vmatpush1.msra.mxu0 0.0
  %1477 = vmatprep.subr.mxu0 0.0
  %1478 = vmatpush1.msra.mxu0 0.0
  %1479 = vmatprep.subr.mxu0 0.0
  %1480 = vmatpush1.msra.mxu0 0.0
  %1481 = vmatprep.subr.mxu0 0.0
  %1482 = vmatpush1.msra.mxu0 0.0
  %1483 = vmatprep.subr.mxu0 0.0
  %1484 = vmatpush1.msra.mxu0 0.0
  %1485 = vmatprep.subr.mxu0 0.0
  %1486 = vmatpush1.msra.mxu0 0.0
  %1487 = vmatprep.mubr.f32.mxu0 0.0
  %1488 = vmatmul.mubr.f32.gmra.mrb[0].mxu0 %v1421
  %v1489 = vpop.f32.mrb[0].mxu0
  %v1490 = vadd.f32 %v149, %v1489
  %v1491 = vpop.f32.mrb[0].mxu0
  %v1492 = vadd.f32 %v153, %v1491
  %1493 = vdwg.mxu0
  %1495 = vrot.lane.b32.xlu0 %v1417, 64
  %v1496 = vpop.permute.xlu0 %1495
  %v1497 = vsel %vm263, %v1496, 0
  %1499 = vmatprep.subr.mxu0 %v248
  %1500 = vmatpush1.msra.mxu0 %v247
  %1501 = vmatprep.subr.mxu0 %v250
  %1502 = vmatpush1.msra.mxu0 %v249
  %1503 = vmatprep.subr.mxu0 %v252
  %1504 = vmatpush1.msra.mxu0 %v251
  %1505 = vmatprep.subr.mxu0 %v254
  %1506 = vmatpush1.msra.mxu0 %v253
  %1507 = vmatprep.subr.mxu0 %v256
  %1508 = vmatpush1.msra.mxu0 %v255
  %1509 = vmatprep.subr.mxu0 %v258
  %1510 = vmatpush1.msra.mxu0 %v257
  %1511 = vmatprep.subr.mxu0 %v260
  %1512 = vmatpush1.msra.mxu0 %v259
  %1513 = vmatprep.subr.mxu0 %v262
  %1514 = vmatpush1.msra.mxu0 %v261
  %1515 = vmatprep.subr.mxu0 0.0
  %1516 = vmatpush1.msra.mxu0 0.0
  %1517 = vmatprep.subr.mxu0 0.0
  %1518 = vmatpush1.msra.mxu0 0.0
  %1519 = vmatprep.subr.mxu0 0.0
  %1520 = vmatpush1.msra.mxu0 0.0
  %1521 = vmatprep.subr.mxu0 0.0
  %1522 = vmatpush1.msra.mxu0 0.0
  %1523 = vmatprep.subr.mxu0 0.0
  %1524 = vmatpush1.msra.mxu0 0.0
  %1525 = vmatprep.subr.mxu0 0.0
  %1526 = vmatpush1.msra.mxu0 0.0
  %1527 = vmatprep.subr.mxu0 0.0
  %1528 = vmatpush1.msra.mxu0 0.0
  %1529 = vmatprep.subr.mxu0 0.0
  %1530 = vmatpush1.msra.mxu0 0.0
  %1531 = vmatprep.subr.mxu0 0.0
  %1532 = vmatpush1.msra.mxu0 0.0
  %1533 = vmatprep.subr.mxu0 0.0
  %1534 = vmatpush1.msra.mxu0 0.0
  %1535 = vmatprep.subr.mxu0 0.0
  %1536 = vmatpush1.msra.mxu0 0.0
  %1537 = vmatprep.subr.mxu0 0.0
  %1538 = vmatpush1.msra.mxu0 0.0
  %1539 = vmatprep.subr.mxu0 0.0
  %1540 = vmatpush1.msra.mxu0 0.0
  %1541 = vmatprep.subr.mxu0 0.0
  %1542 = vmatpush1.msra.mxu0 0.0
  %1543 = vmatprep.subr.mxu0 0.0
  %1544 = vmatpush1.msra.mxu0 0.0
  %1545 = vmatprep.subr.mxu0 0.0
  %1546 = vmatpush1.msra.mxu0 0.0
  %1547 = vmatprep.subr.mxu0 0.0
  %1548 = vmatpush1.msra.mxu0 0.0
  %1549 = vmatprep.subr.mxu0 0.0
  %1550 = vmatpush1.msra.mxu0 0.0
  %1551 = vmatprep.subr.mxu0 0.0
  %1552 = vmatpush1.msra.mxu0 0.0
  %1553 = vmatprep.subr.mxu0 0.0
  %1554 = vmatpush1.msra.mxu0 0.0
  %1555 = vmatprep.subr.mxu0 0.0
  %1556 = vmatpush1.msra.mxu0 0.0
  %1557 = vmatprep.subr.mxu0 0.0
  %1558 = vmatpush1.msra.mxu0 0.0
  %1559 = vmatprep.subr.mxu0 0.0
  %1560 = vmatpush1.msra.mxu0 0.0
  %1561 = vmatprep.subr.mxu0 0.0
  %1562 = vmatpush1.msra.mxu0 0.0
  %1563 = vmatprep.mubr.f32.mxu0 0.0
  %1564 = vmatmul.mubr.f32.gmra.mrb[0].mxu0 %v1497
  %v1565 = vpop.f32.mrb[0].mxu0
  %v1566 = vadd.f32 0.0, %v1565
  %v1567 = vpop.f32.mrb[0].mxu0
  %v1568 = vadd.f32 0.0, %v1567
  %1569 = vdwg.mxu0
  %v1570 = vadd.f32 %v1490, %v1566
  %v1571 = vadd.f32 %v1492, %v1568
  %v1572 = vxor.u32 %v1570, 2147483648
  %v1573 = vmul.f32 %v1572, 1.442695
  %v1574 = vpow.pop %v1573
  %v1575 = vadd.f32 %v1574, 1.0
  %v1576 = vrcp.pop %v1575
  %v1577 = vmul.f32 1.0, %v1576
  %v1578 = vtanh.pop %v1571
  %v1579 = vxor.u32 %v1571, 2147483648
  %v1580 = vmul.f32 %v1579, 1.442695
  %v1581 = vpow.pop %v1580
  %v1582 = vadd.f32 %v1581, 1.0
  %v1583 = vrcp.pop %v1582
  %v1584 = vmul.f32 1.0, %v1583
  %v1585 = vmul.f32 %v1577, %v1415
  %v1586 = vmul.f32 %v1577, %v1578
  %1588 = vrot.lane.b32.xlu0 %v1586, 64
  %v1589 = vpop.permute.xlu0 %1588
  %v1591 = vadd.f32 %v1585, %v1589
  %v1592 = vtanh.pop %v1591
  %v1593 = vmul.f32 %v1584, %v1592
  %v1594 = vld [vmem:[%s5] sm:$0xff]
  %v1595 = vld [vmem:[%s5 + $0x8] sm:$0xff]
  %v1596 = vld [vmem:[%s5 + $0x10] sm:$0xff]
  %v1597 = vld [vmem:[%s5 + $0x18] sm:$0xff]
  %v1598 = vld [vmem:[%s5 + $0x20] sm:$0xff]
  %v1599 = vld [vmem:[%s5 + $0x28] sm:$0xff]
  %v1600 = vld [vmem:[%s5 + $0x30] sm:$0xff]
  %v1601 = vld [vmem:[%s5 + $0x38] sm:$0xff]
  %1603 = vrot.lane.b32.xlu0 %v1593, 64
  %v1604 = vpop.permute.xlu0 %1603
  %v1605 = vsel %vm263, %v1604, 0
  %1607 = vmatprep.subr.mxu0 0.0
  %1608 = vmatpush1.msra.mxu0 %v1594
  %1609 = vmatprep.subr.mxu0 0.0
  %1610 = vmatpush1.msra.mxu0 %v1595
  %1611 = vmatprep.subr.mxu0 0.0
  %1612 = vmatpush1.msra.mxu0 %v1596
  %1613 = vmatprep.subr.mxu0 0.0
  %1614 = vmatpush1.msra.mxu0 %v1597
  %1615 = vmatprep.subr.mxu0 0.0
  %1616 = vmatpush1.msra.mxu0 %v1598
  %1617 = vmatprep.subr.mxu0 0.0
  %1618 = vmatpush1.msra.mxu0 %v1599
  %1619 = vmatprep.subr.mxu0 0.0
  %1620 = vmatpush1.msra.mxu0 %v1600
  %1621 = vmatprep.subr.mxu0 0.0
  %1622 = vmatpush1.msra.mxu0 %v1601
  %1623 = vmatprep.subr.mxu0 0.0
  %1624 = vmatpush1.msra.mxu0 0.0
  %1625 = vmatprep.subr.mxu0 0.0
  %1626 = vmatpush1.msra.mxu0 0.0
  %1627 = vmatprep.subr.mxu0 0.0
  %1628 = vmatpush1.msra.mxu0 0.0
  %1629 = vmatprep.subr.mxu0 0.0
  %1630 = vmatpush1.msra.mxu0 0.0
  %1631 = vmatprep.subr.mxu0 0.0
  %1632 = vmatpush1.msra.mxu0 0.0
  %1633 = vmatprep.subr.mxu0 0.0
  %1634 = vmatpush1.msra.mxu0 0.0
  %1635 = vmatprep.subr.mxu0 0.0
  %1636 = vmatpush1.msra.mxu0 0.0
  %1637 = vmatprep.subr.mxu0 0.0
  %1638 = vmatpush1.msra.mxu0 0.0
  %1639 = vmatprep.subr.mxu0 0.0
  %1640 = vmatpush1.msra.mxu0 0.0
  %1641 = vmatprep.subr.mxu0 0.0
  %1642 = vmatpush1.msra.mxu0 0.0
  %1643 = vmatprep.subr.mxu0 0.0
  %1644 = vmatpush1.msra.mxu0 0.0
  %1645 = vmatprep.subr.mxu0 0.0
  %1646 = vmatpush1.msra.mxu0 0.0
  %1647 = vmatprep.subr.mxu0 0.0
  %1648 = vmatpush1.msra.mxu0 0.0
  %1649 = vmatprep.subr.mxu0 0.0
  %1650 = vmatpush1.msra.mxu0 0.0
  %1651 = vmatprep.subr.mxu0 0.0
  %1652 = vmatpush1.msra.mxu0 0.0
  %1653 = vmatprep.subr.mxu0 0.0
  %1654 = vmatpush1.msra.mxu0 0.0
  %1655 = vmatprep.subr.mxu0 0.0
  %1656 = vmatpush1.msra.mxu0 0.0
  %1657 = vmatprep.subr.mxu0 0.0
  %1658 = vmatpush1.msra.mxu0 0.0
  %1659 = vmatprep.subr.mxu0 0.0
  %1660 = vmatpush1.msra.mxu0 0.0
  %1661 = vmatprep.subr.mxu0 0.0
  %1662 = vmatpush1.msra.mxu0 0.0
  %1663 = vmatprep.subr.mxu0 0.0
  %1664 = vmatpush1.msra.mxu0 0.0
  %1665 = vmatprep.subr.mxu0 0.0
  %1666 = vmatpush1.msra.mxu0 0.0
  %1667 = vmatprep.subr.mxu0 0.0
  %1668 = vmatpush1.msra.mxu0 0.0
  %1669 = vmatprep.subr.mxu0 0.0
  %1670 = vmatpush1.msra.mxu0 0.0
  %1671 = vmatprep.mubr.f32.mxu0 0.0
  %1672 = vmatmul.mubr.f32.gmra.mrb[0].mxu0 %v1605
  %v1673 = vpop.f32.mrb[0].mxu0
  %v1674 = vadd.f32 %v141, %v1673
  %v1675 = vpop.f32.mrb[0].mxu0
  %1676 = vdwg.mxu0
  %vm1677 = vcmp.ge.f32.partialorder %v1674, 0.0
  %v1678 = vmul.f32 %v1674, 0.01
  %v1679 = vsel %vm1677, %v1674, %v1678
  %vm1680 = vcmask 3072
  %1681 = vst.msk [vmem:[%s8] sm:$0xf] %vm1680, %v1679
  // Predicated region
  $region34: #{tpu_custom_call.1} parent=0 // pred_check
    _
  $region35: #{tpu_custom_call.1} parent=0 // pred_check_branch
    %1683 = sbr.rel (0) target = $region37
  $region36: #{tpu_custom_call.1} parent=0 // pred_region
    _
  $region37: #{tpu_custom_call.1} parent=0 // pred_fallthru
    _
  // Predicated region
  $region38: #{tpu_custom_call.1} parent=0 // pred_check
    _
  $region39: #{tpu_custom_call.1} parent=0 // pred_check_branch
    %1685 = sbr.rel (0) target = $region41
  $region40: #{tpu_custom_call.1} parent=0 // pred_region
    _
  $region41: #{tpu_custom_call.1} parent=0 // pred_fallthru
    _

</llo_original>
